<compile_context>
chip_gen: v6e
topology: v6e:2x2x1
jax: 0.10.0
libtpu: 0.0.40
codegen_flags: <defaults>
</compile_context>

<pallas_src>
import functools

import numpy as np

import jax
import jax.numpy as jnp
from jax.experimental import pallas as pl
from jax.experimental.pallas import tpu as pltpu

# Matmul-operand dtype.  jnp.bfloat16 on v6e/v7x halves DMA/VMEM bytes and hits
# the bf16 MXU fast path (accumulation stays f32 via preferred_element_type).
# Kept f32 here so the in-script correctness check is tight.
COMPUTE_DTYPE = jnp.float32


# ------------------------------ Pallas kernel ------------------------------- #

def _restrict_kernel(u_pl_ref, f_pl_ref, mask_ref, w_ref, b_ref,
                     fnew_ref, unew_ref, *, Wq2, Lr, L2, compute_dtype):
    """Fused  resid = f - A(u) - bA;  f_new = R(resid)+bR;  u_new = Pi(u)+bPi.

    Layout (per image, channels on sublanes, flat spatial on lanes):
      u_pl_ref : (1, 4, C, LU)  parity planes of u padded by 2 (+ zero slack)
      f_pl_ref : (1, 4, C, Lr)  parity planes of f padded by (1,3)
      mask_ref : (4, 1, Lr)     1.0 on interior resid positions, 0.0 on border
      w_ref    : (3, C, 9C)     [A, R, Pi] weights, col = (kh*3+kw)*C + cin
      b_ref    : (3, C, 1)      [A, R, Pi] biases
      outputs  : (1, C, L2)     f_new / u_new, row stride Wq2 (2 garbage cols)
    Plane index = 2*row_parity + col_parity; every plane uses row stride Wq2,
    so each 3x3 tap is a contiguous lane-slice at a static offset.
    """
    cd = compute_dtype
    w_a = w_ref[0].astype(cd)                 # (C, 9C)
    w_r = w_ref[1].astype(cd)
    w_pi = w_ref[2].astype(cd)
    b_a = b_ref[0].astype(jnp.float32)        # (C, 1)
    b_r = b_ref[1].astype(jnp.float32)
    b_pi = b_ref[2].astype(jnp.float32)

    # ---- stage 1: resid = f - A(u) - bA, computed per parity plane ---------
    resid = {}
    for r in (0, 1):
        for s in (0, 1):
            taps = []
            for kh in range(3):
                for kw in range(3):
                    aa, bb = r + kh, s + kw           # offsets in pad-2 coords
                    plane = (aa % 2) * 2 + (bb % 2)
                    start = (aa // 2) * Wq2 + (bb // 2)
                    taps.append(u_pl_ref[0, plane, :, start:start + Lr])
            patch = jnp.concatenate(taps, axis=0).astype(cd)         # (9C, Lr)
            conv = jnp.dot(w_a, patch, preferred_element_type=jnp.float32)
            f_pl = f_pl_ref[0, r * 2 + s].astype(jnp.float32)        # (C, Lr)
            m = mask_ref[r * 2 + s].astype(jnp.float32)              # (1, Lr)
            resid[(r, s)] = (f_pl - conv - b_a) * m                  # (C, Lr)

    # ---- stage 2: f_new = R(resid)+bR, u_new = Pi(u)+bPi (stride 2, pad 1) --
    r_taps, u_taps = [], []
    for kh in range(3):
        for kw in range(3):
            # R reads the pad-1 parity planes of resid (kept as values).
            start_r = (kh // 2) * Wq2 + (kw // 2)
            r_taps.append(resid[(kh % 2, kw % 2)][:, start_r:start_r + L2])
            # Pi reads the pad-2 parity planes of u already resident in VMEM.
            aa, bb = kh + 1, kw + 1
            plane = (aa % 2) * 2 + (bb % 2)
            start_u = (aa // 2) * Wq2 + (bb // 2)
            u_taps.append(u_pl_ref[0, plane, :, start_u:start_u + L2])
    patch_r = jnp.concatenate(r_taps, axis=0).astype(cd)             # (9C, L2)
    patch_u = jnp.concatenate(u_taps, axis=0).astype(cd)             # (9C, L2)
    f_new = jnp.dot(w_r, patch_r, preferred_element_type=jnp.float32) + b_r
    u_new = jnp.dot(w_pi, patch_u, preferred_element_type=jnp.float32) + b_pi

    fnew_ref[0] = f_new.astype(fnew_ref.dtype)
    unew_ref[0] = u_new.astype(unew_ref.dtype)


# ------------------------------ host-side prep ------------------------------ #

def _parity_planes(x_pad):
    """(N, C, 2*Hq, 2*Wq) -> (N, 4, C, Hq*Wq); plane = 2*row_parity + col_parity."""
    N, C, H2, W2 = x_pad.shape
    Hq, Wq = H2 // 2, W2 // 2
    x = x_pad.reshape(N, C, Hq, 2, Wq, 2)
    x = jnp.transpose(x, (0, 3, 5, 1, 2, 4))          # (N, 2, 2, C, Hq, Wq)
    return x.reshape(N, 4, C, Hq * Wq)


def _border_masks(H, W):
    """(4, 1, Lr) f32: 1.0 where the resid parity-plane position is interior."""
    Ho, Wo = H // 2, W // 2
    Hq2, Wq2 = Ho + 2, Wo + 2
    ii = np.arange(Hq2)[:, None]
    jj = np.arange(Wq2)[None, :]
    planes = []
    for r in (0, 1):
        for s in (0, 1):
            y = 2 * ii + r                             # padded-resid row index
            x = 2 * jj + s                             # padded-resid col index
            m = (y >= 1) & (y <= H) & (x >= 1) & (x <= W)
            planes.append(m.astype(np.float32).reshape(-1))
    return jnp.asarray(np.stack(planes)[:, None, :])   # (4, 1, Hq2*Wq2)


def _flatten_w(w_oihw):
    """(Co, Ci, 3, 3) -> (Co, 9*Ci) with column order (kh*3 + kw)*Ci + ci."""
    co, ci = w_oihw.shape[:2]
    return jnp.transpose(w_oihw, (0, 2, 3, 1)).reshape(co, 9 * ci)


@jax.jit
def _restrict_forward(params, u_nchw, f_nchw):
    N, C, H, W = u_nchw.shape
    assert H % 2 == 0 and W % 2 == 0, "even spatial dims expected"
    Ho, Wo = H // 2, W // 2
    Hq2, Wq2 = Ho + 2, Wo + 2
    Lr = Hq2 * Wq2                 # stage-1 plane length (incl. garbage row/col)
    LU = Lr + 2 * Wq2              # u-plane length incl. trailing zero slack
    L2 = Ho * Wq2                  # stage-2 output length (2 garbage cols/row)

    # Parity-plane (2x2 space-to-depth) inputs: channels on sublanes, flat
    # spatial on lanes.  Single fused pad+transpose per input under jit.
    u_planes = _parity_planes(jnp.pad(u_nchw, ((0, 0), (0, 0), (2, 2), (2, 2))))
    u_planes = jnp.pad(u_planes, ((0, 0), (0, 0), (0, 0), (0, 2 * Wq2)))
    f_planes = _parity_planes(jnp.pad(f_nchw, ((0, 0), (0, 0), (1, 3), (1, 3))))
    masks = _border_masks(H, W)

    w_all = jnp.stack([_flatten_w(params["A_w"]),
                       _flatten_w(params["R_w"]),
                       _flatten_w(params["Pi_w"])])                  # (3, C, 9C)
    b_all = jnp.stack([params["A_b"], params["R_b"],
                       params["Pi_b"]]).reshape(3, C, 1)

    kernel = functools.partial(_restrict_kernel, Wq2=Wq2, Lr=Lr, L2=L2,
                               compute_dtype=COMPUTE_DTYPE)
    f_new_flat, u_new_flat = pl.pallas_call(
        kernel,
        out_shape=(jax.ShapeDtypeStruct((N, C, L2), f_nchw.dtype),
                   jax.ShapeDtypeStruct((N, C, L2), u_nchw.dtype)),
        grid=(N,),
        in_specs=[
            pl.BlockSpec((1, 4, C, LU), lambda n: (n, 0, 0, 0)),
            pl.BlockSpec((1, 4, C, Lr), lambda n: (n, 0, 0, 0)),
            pl.BlockSpec((4, 1, Lr), lambda n: (0, 0, 0)),        # resident
            pl.BlockSpec((3, C, 9 * C), lambda n: (0, 0, 0)),     # resident
            pl.BlockSpec((3, C, 1), lambda n: (0, 0, 0)),         # resident
        ],
        out_specs=(pl.BlockSpec((1, C, L2), lambda n: (n, 0, 0)),
                   pl.BlockSpec((1, C, L2), lambda n: (n, 0, 0))),
        compiler_params=pltpu.CompilerParams(
            dimension_semantics=("parallel",),     # batch steps across TCs
            vmem_limit_bytes=32 * 1024 * 1024),
    )(u_planes, f_planes, masks, w_all, b_all)

    # Drop the garbage columns (row stride Wq2 -> Wo); stays NCHW, no transposes.
    f_new = f_new_flat.reshape(N, C, Ho, Wq2)[..., :Wo]
    u_new = u_new_flat.reshape(N, C, Ho, Wq2)[..., :Wo]
    return u_new, f_new


# ------------------------------ Restrict module ----------------------------- #

class RestrictPallas:
    """Pallas port of baselines/unet.py::Restrict (downsampling stage of MgConv)
    with A = Conv2d(C, C, 3, 1, 1), R = Pi = Conv2d(C, C, 3, 2, 1).  Biases are
    kept general (the spec's bias=False case is just zeros)."""

    def __init__(self, channels, key):
        ks = jax.random.split(key, 6)
        s = 0.1
        self.A_w = s * jax.random.normal(ks[0], (channels, channels, 3, 3), jnp.float32)
        self.A_b = s * jax.random.normal(ks[1], (channels,), jnp.float32)
        self.R_w = s * jax.random.normal(ks[2], (channels, channels, 3, 3), jnp.float32)
        self.R_b = s * jax.random.normal(ks[3], (channels,), jnp.float32)
        self.Pi_w = s * jax.random.normal(ks[4], (channels, channels, 3, 3), jnp.float32)
        self.Pi_b = s * jax.random.normal(ks[5], (channels,), jnp.float32)

    def params(self):
        return {"A_w": self.A_w, "A_b": self.A_b,
                "R_w": self.R_w, "R_b": self.R_b,
                "Pi_w": self.Pi_w, "Pi_b": self.Pi_b}

    def __call__(self, out):
        u_nchw, f_nchw = out
        return _restrict_forward(self.params(), u_nchw, f_nchw)


# ------------------------------ reference check ----------------------------- #

def _conv_ref(x_nchw, w_oihw, b, stride):
    y = jax.lax.conv_general_dilated(
        x_nchw, w_oihw, window_strides=(stride, stride),
        padding=((1, 1), (1, 1)),
        dimension_numbers=("NCHW", "OIHW", "NCHW"))
    return y + b.reshape(1, -1, 1, 1)


def _restrict_ref(mod, u_nchw, f_nchw):
    resid = f_nchw - _conv_ref(u_nchw, mod.A_w, mod.A_b, 1)
    f_new = _conv_ref(resid, mod.R_w, mod.R_b, 2)
    u_new = _conv_ref(u_nchw, mod.Pi_w, mod.Pi_b, 2)
    return u_new, f_new


if __name__ == "__main__":
    key = jax.random.PRNGKey(0)
    k_u, k_f, k_p = jax.random.split(key, 3)

    N, C, H, W = 2, 4, 16, 16
    u = jax.random.normal(k_u, (N, C, H, W), jnp.float32)   # NCHW, like PyTorch
    f = jax.random.normal(k_f, (N, C, H, W), jnp.float32)

    mod = RestrictPallas(C, k_p)

    u_out, f_out = mod((u, f))
    u_out = jax.block_until_ready(u_out)
    f_out = jax.block_until_ready(f_out)

    assert u_out.shape == (N, C, H // 2, W // 2)
    assert f_out.shape == (N, C, H // 2, W // 2)

    u_ref, f_ref = _restrict_ref(mod, u, f)
    assert jnp.allclose(u_out, u_ref, atol=2e-3, rtol=2e-3), \
        float(jnp.max(jnp.abs(u_out - u_ref)))
    assert jnp.allclose(f_out, f_ref, atol=2e-3, rtol=2e-3), \
        float(jnp.max(jnp.abs(f_out - f_ref)))

    print("KERNEL_OK")
</pallas_src>

<mosaic_0001>
module attributes {stable_mosaic.version = 11 : i64} {
  func.func @_restrict_kernel(%arg0: i32, %arg1: memref<1x4x4x120xf32, #tpu.memory_space<vmem>>, %arg2: memref<1x4x4x100xf32, #tpu.memory_space<vmem>>, %arg3: memref<4x1x100xf32, #tpu.memory_space<vmem>>, %arg4: memref<3x4x36xf32, #tpu.memory_space<vmem>>, %arg5: memref<3x4x1xf32, #tpu.memory_space<vmem>>, %arg6: memref<1x4x80xf32, #tpu.memory_space<vmem>>, %arg7: memref<1x4x80xf32, #tpu.memory_space<vmem>>) attributes {dimension_semantics = [#tpu.dimension_semantics<parallel>], iteration_bounds = array<i64: 2>, scalar_prefetch = 0 : i64, scratch_operands = 0 : i64, tpu.core_type = #tpu.core_type<tc>, window_params = [{transform_indices = @transform_0, window_bounds = array<i64: 1, 4, 4, 120>}, {transform_indices = @transform_1, window_bounds = array<i64: 1, 4, 4, 100>}, {pipeline_mode = #tpu.pipeline_mode<synchronous>, transform_indices = @transform_2, window_bounds = array<i64: 4, 1, 100>}, {pipeline_mode = #tpu.pipeline_mode<synchronous>, transform_indices = @transform_3, window_bounds = array<i64: 3, 4, 36>}, {pipeline_mode = #tpu.pipeline_mode<synchronous>, transform_indices = @transform_4, window_bounds = array<i64: 3, 4, 1>}, {transform_indices = @transform_5, window_bounds = array<i64: 1, 4, 80>}, {transform_indices = @transform_6, window_bounds = array<i64: 1, 4, 80>}]} {
    %c0 = arith.constant 0 : index
    %c0_0 = arith.constant 0 : index
    %c0_1 = arith.constant 0 : index
    %0 = vector.load %arg4[%c0, %c0_0, %c0_1] : memref<3x4x36xf32, #tpu.memory_space<vmem>>, vector<1x4x36xf32>
    %1 = vector.shape_cast %0 : vector<1x4x36xf32> to vector<4x36xf32>
    %c1 = arith.constant 1 : index
    %c0_2 = arith.constant 0 : index
    %c0_3 = arith.constant 0 : index
    %2 = vector.load %arg4[%c1, %c0_2, %c0_3] : memref<3x4x36xf32, #tpu.memory_space<vmem>>, vector<1x4x36xf32>
    %3 = vector.shape_cast %2 : vector<1x4x36xf32> to vector<4x36xf32>
    %c2 = arith.constant 2 : index
    %c0_4 = arith.constant 0 : index
    %c0_5 = arith.constant 0 : index
    %4 = vector.load %arg4[%c2, %c0_4, %c0_5] : memref<3x4x36xf32, #tpu.memory_space<vmem>>, vector<1x4x36xf32>
    %5 = vector.shape_cast %4 : vector<1x4x36xf32> to vector<4x36xf32>
    %c0_6 = arith.constant 0 : index
    %c0_7 = arith.constant 0 : index
    %c0_8 = arith.constant 0 : index
    %6 = vector.load %arg5[%c0_6, %c0_7, %c0_8] : memref<3x4x1xf32, #tpu.memory_space<vmem>>, vector<1x4x1xf32>
    %7 = vector.shape_cast %6 : vector<1x4x1xf32> to vector<4x1xf32>
    %c1_9 = arith.constant 1 : index
    %c0_10 = arith.constant 0 : index
    %c0_11 = arith.constant 0 : index
    %8 = vector.load %arg5[%c1_9, %c0_10, %c0_11] : memref<3x4x1xf32, #tpu.memory_space<vmem>>, vector<1x4x1xf32>
    %9 = vector.shape_cast %8 : vector<1x4x1xf32> to vector<4x1xf32>
    %c2_12 = arith.constant 2 : index
    %c0_13 = arith.constant 0 : index
    %c0_14 = arith.constant 0 : index
    %10 = vector.load %arg5[%c2_12, %c0_13, %c0_14] : memref<3x4x1xf32, #tpu.memory_space<vmem>>, vector<1x4x1xf32>
    %11 = vector.shape_cast %10 : vector<1x4x1xf32> to vector<4x1xf32>
    %c0_15 = arith.constant 0 : index
    %c0_16 = arith.constant 0 : index
    %c0_17 = arith.constant 0 : index
    %c0_18 = arith.constant 0 : index
    %12 = vector.load %arg1[%c0_15, %c0_16, %c0_17, %c0_18] : memref<1x4x4x120xf32, #tpu.memory_space<vmem>>, vector<1x1x4x100xf32>
    %13 = vector.shape_cast %12 : vector<1x1x4x100xf32> to vector<4x100xf32>
    %c0_19 = arith.constant 0 : index
    %c1_20 = arith.constant 1 : index
    %c0_21 = arith.constant 0 : index
    %c0_22 = arith.constant 0 : index
    %14 = vector.load %arg1[%c0_19, %c1_20, %c0_21, %c0_22] : memref<1x4x4x120xf32, #tpu.memory_space<vmem>>, vector<1x1x4x100xf32>
    %15 = vector.shape_cast %14 : vector<1x1x4x100xf32> to vector<4x100xf32>
    %c0_23 = arith.constant 0 : index
    %c0_24 = arith.constant 0 : index
    %c0_25 = arith.constant 0 : index
    %c1_26 = arith.constant 1 : index
    %16 = vector.load %arg1[%c0_23, %c0_24, %c0_25, %c1_26] : memref<1x4x4x120xf32, #tpu.memory_space<vmem>>, vector<1x1x4x100xf32>
    %17 = vector.shape_cast %16 : vector<1x1x4x100xf32> to vector<4x100xf32>
    %c0_27 = arith.constant 0 : index
    %c2_28 = arith.constant 2 : index
    %c0_29 = arith.constant 0 : index
    %c0_30 = arith.constant 0 : index
    %18 = vector.load %arg1[%c0_27, %c2_28, %c0_29, %c0_30] : memref<1x4x4x120xf32, #tpu.memory_space<vmem>>, vector<1x1x4x100xf32>
    %19 = vector.shape_cast %18 : vector<1x1x4x100xf32> to vector<4x100xf32>
    %c0_31 = arith.constant 0 : index
    %c3 = arith.constant 3 : index
    %c0_32 = arith.constant 0 : index
    %c0_33 = arith.constant 0 : index
    %20 = vector.load %arg1[%c0_31, %c3, %c0_32, %c0_33] : memref<1x4x4x120xf32, #tpu.memory_space<vmem>>, vector<1x1x4x100xf32>
    %21 = vector.shape_cast %20 : vector<1x1x4x100xf32> to vector<4x100xf32>
    %c0_34 = arith.constant 0 : index
    %c2_35 = arith.constant 2 : index
    %c0_36 = arith.constant 0 : index
    %c1_37 = arith.constant 1 : index
    %22 = vector.load %arg1[%c0_34, %c2_35, %c0_36, %c1_37] : memref<1x4x4x120xf32, #tpu.memory_space<vmem>>, vector<1x1x4x100xf32>
    %23 = vector.shape_cast %22 : vector<1x1x4x100xf32> to vector<4x100xf32>
    %c0_38 = arith.constant 0 : index
    %c0_39 = arith.constant 0 : index
    %c0_40 = arith.constant 0 : index
    %c10 = arith.constant 10 : index
    %24 = vector.load %arg1[%c0_38, %c0_39, %c0_40, %c10] : memref<1x4x4x120xf32, #tpu.memory_space<vmem>>, vector<1x1x4x100xf32>
    %25 = vector.shape_cast %24 : vector<1x1x4x100xf32> to vector<4x100xf32>
    %c0_41 = arith.constant 0 : index
    %c1_42 = arith.constant 1 : index
    %c0_43 = arith.constant 0 : index
    %c10_44 = arith.constant 10 : index
    %26 = vector.load %arg1[%c0_41, %c1_42, %c0_43, %c10_44] : memref<1x4x4x120xf32, #tpu.memory_space<vmem>>, vector<1x1x4x100xf32>
    %27 = vector.shape_cast %26 : vector<1x1x4x100xf32> to vector<4x100xf32>
    %c0_45 = arith.constant 0 : index
    %c0_46 = arith.constant 0 : index
    %c0_47 = arith.constant 0 : index
    %c11 = arith.constant 11 : index
    %28 = vector.load %arg1[%c0_45, %c0_46, %c0_47, %c11] : memref<1x4x4x120xf32, #tpu.memory_space<vmem>>, vector<1x1x4x100xf32>
    %29 = vector.shape_cast %28 : vector<1x1x4x100xf32> to vector<4x100xf32>
    %30 = tpu.concatenate %13, %15, %17, %19, %21, %23, %25, %27, %29 in 0 : vector<4x100xf32>, vector<4x100xf32>, vector<4x100xf32>, vector<4x100xf32>, vector<4x100xf32>, vector<4x100xf32>, vector<4x100xf32>, vector<4x100xf32>, vector<4x100xf32> -> vector<36x100xf32>
    %cst = arith.constant dense<0.000000e+00> : vector<4x100xf32>
    %31 = tpu.matmul %1, %30, %cst {dimension_numbers = #tpu.dot_dimension_numbers<[1], [0], [0], [1], [0, 0, 1, 1], [], []>} : vector<4x36xf32>, vector<36x100xf32>, vector<4x100xf32> -> vector<4x100xf32>
    %c0_48 = arith.constant 0 : index
    %c0_49 = arith.constant 0 : index
    %c0_50 = arith.constant 0 : index
    %c0_51 = arith.constant 0 : index
    %32 = vector.load %arg2[%c0_48, %c0_49, %c0_50, %c0_51] : memref<1x4x4x100xf32, #tpu.memory_space<vmem>>, vector<1x1x4x100xf32>
    %33 = vector.shape_cast %32 : vector<1x1x4x100xf32> to vector<4x100xf32>
    %c0_52 = arith.constant 0 : index
    %c0_53 = arith.constant 0 : index
    %c0_54 = arith.constant 0 : index
    %34 = vector.load %arg3[%c0_52, %c0_53, %c0_54] : memref<4x1x100xf32, #tpu.memory_space<vmem>>, vector<1x1x100xf32>
    %35 = vector.shape_cast %34 : vector<1x1x100xf32> to vector<1x100xf32>
    %36 = arith.subf %33, %31 : vector<4x100xf32>
    %37 = vector.broadcast %7 : vector<4x1xf32> to vector<4x100xf32>
    %38 = arith.subf %36, %37 : vector<4x100xf32>
    %39 = vector.broadcast %35 : vector<1x100xf32> to vector<4x100xf32>
    %40 = arith.mulf %38, %39 : vector<4x100xf32>
    %c0_55 = arith.constant 0 : index
    %c1_56 = arith.constant 1 : index
    %c0_57 = arith.constant 0 : index
    %c0_58 = arith.constant 0 : index
    %41 = vector.load %arg1[%c0_55, %c1_56, %c0_57, %c0_58] : memref<1x4x4x120xf32, #tpu.memory_space<vmem>>, vector<1x1x4x100xf32>
    %42 = vector.shape_cast %41 : vector<1x1x4x100xf32> to vector<4x100xf32>
    %c0_59 = arith.constant 0 : index
    %c0_60 = arith.constant 0 : index
    %c0_61 = arith.constant 0 : index
    %c1_62 = arith.constant 1 : index
    %43 = vector.load %arg1[%c0_59, %c0_60, %c0_61, %c1_62] : memref<1x4x4x120xf32, #tpu.memory_space<vmem>>, vector<1x1x4x100xf32>
    %44 = vector.shape_cast %43 : vector<1x1x4x100xf32> to vector<4x100xf32>
    %c0_63 = arith.constant 0 : index
    %c1_64 = arith.constant 1 : index
    %c0_65 = arith.constant 0 : index
    %c1_66 = arith.constant 1 : index
    %45 = vector.load %arg1[%c0_63, %c1_64, %c0_65, %c1_66] : memref<1x4x4x120xf32, #tpu.memory_space<vmem>>, vector<1x1x4x100xf32>
    %46 = vector.shape_cast %45 : vector<1x1x4x100xf32> to vector<4x100xf32>
    %c0_67 = arith.constant 0 : index
    %c3_68 = arith.constant 3 : index
    %c0_69 = arith.constant 0 : index
    %c0_70 = arith.constant 0 : index
    %47 = vector.load %arg1[%c0_67, %c3_68, %c0_69, %c0_70] : memref<1x4x4x120xf32, #tpu.memory_space<vmem>>, vector<1x1x4x100xf32>
    %48 = vector.shape_cast %47 : vector<1x1x4x100xf32> to vector<4x100xf32>
    %c0_71 = arith.constant 0 : index
    %c2_72 = arith.constant 2 : index
    %c0_73 = arith.constant 0 : index
    %c1_74 = arith.constant 1 : index
    %49 = vector.load %arg1[%c0_71, %c2_72, %c0_73, %c1_74] : memref<1x4x4x120xf32, #tpu.memory_space<vmem>>, vector<1x1x4x100xf32>
    %50 = vector.shape_cast %49 : vector<1x1x4x100xf32> to vector<4x100xf32>
    %c0_75 = arith.constant 0 : index
    %c3_76 = arith.constant 3 : index
    %c0_77 = arith.constant 0 : index
    %c1_78 = arith.constant 1 : index
    %51 = vector.load %arg1[%c0_75, %c3_76, %c0_77, %c1_78] : memref<1x4x4x120xf32, #tpu.memory_space<vmem>>, vector<1x1x4x100xf32>
    %52 = vector.shape_cast %51 : vector<1x1x4x100xf32> to vector<4x100xf32>
    %c0_79 = arith.constant 0 : index
    %c1_80 = arith.constant 1 : index
    %c0_81 = arith.constant 0 : index
    %c10_82 = arith.constant 10 : index
    %53 = vector.load %arg1[%c0_79, %c1_80, %c0_81, %c10_82] : memref<1x4x4x120xf32, #tpu.memory_space<vmem>>, vector<1x1x4x100xf32>
    %54 = vector.shape_cast %53 : vector<1x1x4x100xf32> to vector<4x100xf32>
    %c0_83 = arith.constant 0 : index
    %c0_84 = arith.constant 0 : index
    %c0_85 = arith.constant 0 : index
    %c11_86 = arith.constant 11 : index
    %55 = vector.load %arg1[%c0_83, %c0_84, %c0_85, %c11_86] : memref<1x4x4x120xf32, #tpu.memory_space<vmem>>, vector<1x1x4x100xf32>
    %56 = vector.shape_cast %55 : vector<1x1x4x100xf32> to vector<4x100xf32>
    %c0_87 = arith.constant 0 : index
    %c1_88 = arith.constant 1 : index
    %c0_89 = arith.constant 0 : index
    %c11_90 = arith.constant 11 : index
    %57 = vector.load %arg1[%c0_87, %c1_88, %c0_89, %c11_90] : memref<1x4x4x120xf32, #tpu.memory_space<vmem>>, vector<1x1x4x100xf32>
    %58 = vector.shape_cast %57 : vector<1x1x4x100xf32> to vector<4x100xf32>
    %59 = tpu.concatenate %42, %44, %46, %48, %50, %52, %54, %56, %58 in 0 : vector<4x100xf32>, vector<4x100xf32>, vector<4x100xf32>, vector<4x100xf32>, vector<4x100xf32>, vector<4x100xf32>, vector<4x100xf32>, vector<4x100xf32>, vector<4x100xf32> -> vector<36x100xf32>
    %cst_91 = arith.constant dense<0.000000e+00> : vector<4x100xf32>
    %60 = tpu.matmul %1, %59, %cst_91 {dimension_numbers = #tpu.dot_dimension_numbers<[1], [0], [0], [1], [0, 0, 1, 1], [], []>} : vector<4x36xf32>, vector<36x100xf32>, vector<4x100xf32> -> vector<4x100xf32>
    %c0_92 = arith.constant 0 : index
    %c1_93 = arith.constant 1 : index
    %c0_94 = arith.constant 0 : index
    %c0_95 = arith.constant 0 : index
    %61 = vector.load %arg2[%c0_92, %c1_93, %c0_94, %c0_95] : memref<1x4x4x100xf32, #tpu.memory_space<vmem>>, vector<1x1x4x100xf32>
    %62 = vector.shape_cast %61 : vector<1x1x4x100xf32> to vector<4x100xf32>
    %c1_96 = arith.constant 1 : index
    %c0_97 = arith.constant 0 : index
    %c0_98 = arith.constant 0 : index
    %63 = vector.load %arg3[%c1_96, %c0_97, %c0_98] : memref<4x1x100xf32, #tpu.memory_space<vmem>>, vector<1x1x100xf32>
    %64 = vector.shape_cast %63 : vector<1x1x100xf32> to vector<1x100xf32>
    %65 = arith.subf %62, %60 : vector<4x100xf32>
    %66 = vector.broadcast %7 : vector<4x1xf32> to vector<4x100xf32>
    %67 = arith.subf %65, %66 : vector<4x100xf32>
    %68 = vector.broadcast %64 : vector<1x100xf32> to vector<4x100xf32>
    %69 = arith.mulf %67, %68 : vector<4x100xf32>
    %c0_99 = arith.constant 0 : index
    %c2_100 = arith.constant 2 : index
    %c0_101 = arith.constant 0 : index
    %c0_102 = arith.constant 0 : index
    %70 = vector.load %arg1[%c0_99, %c2_100, %c0_101, %c0_102] : memref<1x4x4x120xf32, #tpu.memory_space<vmem>>, vector<1x1x4x100xf32>
    %71 = vector.shape_cast %70 : vector<1x1x4x100xf32> to vector<4x100xf32>
    %c0_103 = arith.constant 0 : index
    %c3_104 = arith.constant 3 : index
    %c0_105 = arith.constant 0 : index
    %c0_106 = arith.constant 0 : index
    %72 = vector.load %arg1[%c0_103, %c3_104, %c0_105, %c0_106] : memref<1x4x4x120xf32, #tpu.memory_space<vmem>>, vector<1x1x4x100xf32>
    %73 = vector.shape_cast %72 : vector<1x1x4x100xf32> to vector<4x100xf32>
    %c0_107 = arith.constant 0 : index
    %c2_108 = arith.constant 2 : index
    %c0_109 = arith.constant 0 : index
    %c1_110 = arith.constant 1 : index
    %74 = vector.load %arg1[%c0_107, %c2_108, %c0_109, %c1_110] : memref<1x4x4x120xf32, #tpu.memory_space<vmem>>, vector<1x1x4x100xf32>
    %75 = vector.shape_cast %74 : vector<1x1x4x100xf32> to vector<4x100xf32>
    %c0_111 = arith.constant 0 : index
    %c0_112 = arith.constant 0 : index
    %c0_113 = arith.constant 0 : index
    %c10_114 = arith.constant 10 : index
    %76 = vector.load %arg1[%c0_111, %c0_112, %c0_113, %c10_114] : memref<1x4x4x120xf32, #tpu.memory_space<vmem>>, vector<1x1x4x100xf32>
    %77 = vector.shape_cast %76 : vector<1x1x4x100xf32> to vector<4x100xf32>
    %c0_115 = arith.constant 0 : index
    %c1_116 = arith.constant 1 : index
    %c0_117 = arith.constant 0 : index
    %c10_118 = arith.constant 10 : index
    %78 = vector.load %arg1[%c0_115, %c1_116, %c0_117, %c10_118] : memref<1x4x4x120xf32, #tpu.memory_space<vmem>>, vector<1x1x4x100xf32>
    %79 = vector.shape_cast %78 : vector<1x1x4x100xf32> to vector<4x100xf32>
    %c0_119 = arith.constant 0 : index
    %c0_120 = arith.constant 0 : index
    %c0_121 = arith.constant 0 : index
    %c11_122 = arith.constant 11 : index
    %80 = vector.load %arg1[%c0_119, %c0_120, %c0_121, %c11_122] : memref<1x4x4x120xf32, #tpu.memory_space<vmem>>, vector<1x1x4x100xf32>
    %81 = vector.shape_cast %80 : vector<1x1x4x100xf32> to vector<4x100xf32>
    %c0_123 = arith.constant 0 : index
    %c2_124 = arith.constant 2 : index
    %c0_125 = arith.constant 0 : index
    %c10_126 = arith.constant 10 : index
    %82 = vector.load %arg1[%c0_123, %c2_124, %c0_125, %c10_126] : memref<1x4x4x120xf32, #tpu.memory_space<vmem>>, vector<1x1x4x100xf32>
    %83 = vector.shape_cast %82 : vector<1x1x4x100xf32> to vector<4x100xf32>
    %c0_127 = arith.constant 0 : index
    %c3_128 = arith.constant 3 : index
    %c0_129 = arith.constant 0 : index
    %c10_130 = arith.constant 10 : index
    %84 = vector.load %arg1[%c0_127, %c3_128, %c0_129, %c10_130] : memref<1x4x4x120xf32, #tpu.memory_space<vmem>>, vector<1x1x4x100xf32>
    %85 = vector.shape_cast %84 : vector<1x1x4x100xf32> to vector<4x100xf32>
    %c0_131 = arith.constant 0 : index
    %c2_132 = arith.constant 2 : index
    %c0_133 = arith.constant 0 : index
    %c11_134 = arith.constant 11 : index
    %86 = vector.load %arg1[%c0_131, %c2_132, %c0_133, %c11_134] : memref<1x4x4x120xf32, #tpu.memory_space<vmem>>, vector<1x1x4x100xf32>
    %87 = vector.shape_cast %86 : vector<1x1x4x100xf32> to vector<4x100xf32>
    %88 = tpu.concatenate %71, %73, %75, %77, %79, %81, %83, %85, %87 in 0 : vector<4x100xf32>, vector<4x100xf32>, vector<4x100xf32>, vector<4x100xf32>, vector<4x100xf32>, vector<4x100xf32>, vector<4x100xf32>, vector<4x100xf32>, vector<4x100xf32> -> vector<36x100xf32>
    %cst_135 = arith.constant dense<0.000000e+00> : vector<4x100xf32>
    %89 = tpu.matmul %1, %88, %cst_135 {dimension_numbers = #tpu.dot_dimension_numbers<[1], [0], [0], [1], [0, 0, 1, 1], [], []>} : vector<4x36xf32>, vector<36x100xf32>, vector<4x100xf32> -> vector<4x100xf32>
    %c0_136 = arith.constant 0 : index
    %c2_137 = arith.constant 2 : index
    %c0_138 = arith.constant 0 : index
    %c0_139 = arith.constant 0 : index
    %90 = vector.load %arg2[%c0_136, %c2_137, %c0_138, %c0_139] : memref<1x4x4x100xf32, #tpu.memory_space<vmem>>, vector<1x1x4x100xf32>
    %91 = vector.shape_cast %90 : vector<1x1x4x100xf32> to vector<4x100xf32>
    %c2_140 = arith.constant 2 : index
    %c0_141 = arith.constant 0 : index
    %c0_142 = arith.constant 0 : index
    %92 = vector.load %arg3[%c2_140, %c0_141, %c0_142] : memref<4x1x100xf32, #tpu.memory_space<vmem>>, vector<1x1x100xf32>
    %93 = vector.shape_cast %92 : vector<1x1x100xf32> to vector<1x100xf32>
    %94 = arith.subf %91, %89 : vector<4x100xf32>
    %95 = vector.broadcast %7 : vector<4x1xf32> to vector<4x100xf32>
    %96 = arith.subf %94, %95 : vector<4x100xf32>
    %97 = vector.broadcast %93 : vector<1x100xf32> to vector<4x100xf32>
    %98 = arith.mulf %96, %97 : vector<4x100xf32>
    %c0_143 = arith.constant 0 : index
    %c3_144 = arith.constant 3 : index
    %c0_145 = arith.constant 0 : index
    %c0_146 = arith.constant 0 : index
    %99 = vector.load %arg1[%c0_143, %c3_144, %c0_145, %c0_146] : memref<1x4x4x120xf32, #tpu.memory_space<vmem>>, vector<1x1x4x100xf32>
    %100 = vector.shape_cast %99 : vector<1x1x4x100xf32> to vector<4x100xf32>
    %c0_147 = arith.constant 0 : index
    %c2_148 = arith.constant 2 : index
    %c0_149 = arith.constant 0 : index
    %c1_150 = arith.constant 1 : index
    %101 = vector.load %arg1[%c0_147, %c2_148, %c0_149, %c1_150] : memref<1x4x4x120xf32, #tpu.memory_space<vmem>>, vector<1x1x4x100xf32>
    %102 = vector.shape_cast %101 : vector<1x1x4x100xf32> to vector<4x100xf32>
    %c0_151 = arith.constant 0 : index
    %c3_152 = arith.constant 3 : index
    %c0_153 = arith.constant 0 : index
    %c1_154 = arith.constant 1 : index
    %103 = vector.load %arg1[%c0_151, %c3_152, %c0_153, %c1_154] : memref<1x4x4x120xf32, #tpu.memory_space<vmem>>, vector<1x1x4x100xf32>
    %104 = vector.shape_cast %103 : vector<1x1x4x100xf32> to vector<4x100xf32>
    %c0_155 = arith.constant 0 : index
    %c1_156 = arith.constant 1 : index
    %c0_157 = arith.constant 0 : index
    %c10_158 = arith.constant 10 : index
    %105 = vector.load %arg1[%c0_155, %c1_156, %c0_157, %c10_158] : memref<1x4x4x120xf32, #tpu.memory_space<vmem>>, vector<1x1x4x100xf32>
    %106 = vector.shape_cast %105 : vector<1x1x4x100xf32> to vector<4x100xf32>
    %c0_159 = arith.constant 0 : index
    %c0_160 = arith.constant 0 : index
    %c0_161 = arith.constant 0 : index
    %c11_162 = arith.constant 11 : index
    %107 = vector.load %arg1[%c0_159, %c0_160, %c0_161, %c11_162] : memref<1x4x4x120xf32, #tpu.memory_space<vmem>>, vector<1x1x4x100xf32>
    %108 = vector.shape_cast %107 : vector<1x1x4x100xf32> to vector<4x100xf32>
    %c0_163 = arith.constant 0 : index
    %c1_164 = arith.constant 1 : index
    %c0_165 = arith.constant 0 : index
    %c11_166 = arith.constant 11 : index
    %109 = vector.load %arg1[%c0_163, %c1_164, %c0_165, %c11_166] : memref<1x4x4x120xf32, #tpu.memory_space<vmem>>, vector<1x1x4x100xf32>
    %110 = vector.shape_cast %109 : vector<1x1x4x100xf32> to vector<4x100xf32>
    %c0_167 = arith.constant 0 : index
    %c3_168 = arith.constant 3 : index
    %c0_169 = arith.constant 0 : index
    %c10_170 = arith.constant 10 : index
    %111 = vector.load %arg1[%c0_167, %c3_168, %c0_169, %c10_170] : memref<1x4x4x120xf32, #tpu.memory_space<vmem>>, vector<1x1x4x100xf32>
    %112 = vector.shape_cast %111 : vector<1x1x4x100xf32> to vector<4x100xf32>
    %c0_171 = arith.constant 0 : index
    %c2_172 = arith.constant 2 : index
    %c0_173 = arith.constant 0 : index
    %c11_174 = arith.constant 11 : index
    %113 = vector.load %arg1[%c0_171, %c2_172, %c0_173, %c11_174] : memref<1x4x4x120xf32, #tpu.memory_space<vmem>>, vector<1x1x4x100xf32>
    %114 = vector.shape_cast %113 : vector<1x1x4x100xf32> to vector<4x100xf32>
    %c0_175 = arith.constant 0 : index
    %c3_176 = arith.constant 3 : index
    %c0_177 = arith.constant 0 : index
    %c11_178 = arith.constant 11 : index
    %115 = vector.load %arg1[%c0_175, %c3_176, %c0_177, %c11_178] : memref<1x4x4x120xf32, #tpu.memory_space<vmem>>, vector<1x1x4x100xf32>
    %116 = vector.shape_cast %115 : vector<1x1x4x100xf32> to vector<4x100xf32>
    %117 = tpu.concatenate %100, %102, %104, %106, %108, %110, %112, %114, %116 in 0 : vector<4x100xf32>, vector<4x100xf32>, vector<4x100xf32>, vector<4x100xf32>, vector<4x100xf32>, vector<4x100xf32>, vector<4x100xf32>, vector<4x100xf32>, vector<4x100xf32> -> vector<36x100xf32>
    %cst_179 = arith.constant dense<0.000000e+00> : vector<4x100xf32>
    %118 = tpu.matmul %1, %117, %cst_179 {dimension_numbers = #tpu.dot_dimension_numbers<[1], [0], [0], [1], [0, 0, 1, 1], [], []>} : vector<4x36xf32>, vector<36x100xf32>, vector<4x100xf32> -> vector<4x100xf32>
    %c0_180 = arith.constant 0 : index
    %c3_181 = arith.constant 3 : index
    %c0_182 = arith.constant 0 : index
    %c0_183 = arith.constant 0 : index
    %119 = vector.load %arg2[%c0_180, %c3_181, %c0_182, %c0_183] : memref<1x4x4x100xf32, #tpu.memory_space<vmem>>, vector<1x1x4x100xf32>
    %120 = vector.shape_cast %119 : vector<1x1x4x100xf32> to vector<4x100xf32>
    %c3_184 = arith.constant 3 : index
    %c0_185 = arith.constant 0 : index
    %c0_186 = arith.constant 0 : index
    %121 = vector.load %arg3[%c3_184, %c0_185, %c0_186] : memref<4x1x100xf32, #tpu.memory_space<vmem>>, vector<1x1x100xf32>
    %122 = vector.shape_cast %121 : vector<1x1x100xf32> to vector<1x100xf32>
    %123 = arith.subf %120, %118 : vector<4x100xf32>
    %124 = vector.broadcast %7 : vector<4x1xf32> to vector<4x100xf32>
    %125 = arith.subf %123, %124 : vector<4x100xf32>
    %126 = vector.broadcast %122 : vector<1x100xf32> to vector<4x100xf32>
    %127 = arith.mulf %125, %126 : vector<4x100xf32>
    %128 = vector.extract_strided_slice %40 {offsets = [0, 0], sizes = [4, 80], strides = [1, 1]} : vector<4x100xf32> to vector<4x80xf32>
    %c0_187 = arith.constant 0 : index
    %c3_188 = arith.constant 3 : index
    %c0_189 = arith.constant 0 : index
    %c0_190 = arith.constant 0 : index
    %129 = vector.load %arg1[%c0_187, %c3_188, %c0_189, %c0_190] : memref<1x4x4x120xf32, #tpu.memory_space<vmem>>, vector<1x1x4x80xf32>
    %130 = vector.shape_cast %129 : vector<1x1x4x80xf32> to vector<4x80xf32>
    %131 = vector.extract_strided_slice %69 {offsets = [0, 0], sizes = [4, 80], strides = [1, 1]} : vector<4x100xf32> to vector<4x80xf32>
    %c0_191 = arith.constant 0 : index
    %c2_192 = arith.constant 2 : index
    %c0_193 = arith.constant 0 : index
    %c1_194 = arith.constant 1 : index
    %132 = vector.load %arg1[%c0_191, %c2_192, %c0_193, %c1_194] : memref<1x4x4x120xf32, #tpu.memory_space<vmem>>, vector<1x1x4x80xf32>
    %133 = vector.shape_cast %132 : vector<1x1x4x80xf32> to vector<4x80xf32>
    %134 = vector.extract_strided_slice %40 {offsets = [0, 1], sizes = [4, 80], strides = [1, 1]} : vector<4x100xf32> to vector<4x80xf32>
    %c0_195 = arith.constant 0 : index
    %c3_196 = arith.constant 3 : index
    %c0_197 = arith.constant 0 : index
    %c1_198 = arith.constant 1 : index
    %135 = vector.load %arg1[%c0_195, %c3_196, %c0_197, %c1_198] : memref<1x4x4x120xf32, #tpu.memory_space<vmem>>, vector<1x1x4x80xf32>
    %136 = vector.shape_cast %135 : vector<1x1x4x80xf32> to vector<4x80xf32>
    %137 = vector.extract_strided_slice %98 {offsets = [0, 0], sizes = [4, 80], strides = [1, 1]} : vector<4x100xf32> to vector<4x80xf32>
    %c0_199 = arith.constant 0 : index
    %c1_200 = arith.constant 1 : index
    %c0_201 = arith.constant 0 : index
    %c10_202 = arith.constant 10 : index
    %138 = vector.load %arg1[%c0_199, %c1_200, %c0_201, %c10_202] : memref<1x4x4x120xf32, #tpu.memory_space<vmem>>, vector<1x1x4x80xf32>
    %139 = vector.shape_cast %138 : vector<1x1x4x80xf32> to vector<4x80xf32>
    %140 = vector.extract_strided_slice %127 {offsets = [0, 0], sizes = [4, 80], strides = [1, 1]} : vector<4x100xf32> to vector<4x80xf32>
    %c0_203 = arith.constant 0 : index
    %c0_204 = arith.constant 0 : index
    %c0_205 = arith.constant 0 : index
    %c11_206 = arith.constant 11 : index
    %141 = vector.load %arg1[%c0_203, %c0_204, %c0_205, %c11_206] : memref<1x4x4x120xf32, #tpu.memory_space<vmem>>, vector<1x1x4x80xf32>
    %142 = vector.shape_cast %141 : vector<1x1x4x80xf32> to vector<4x80xf32>
    %143 = vector.extract_strided_slice %98 {offsets = [0, 1], sizes = [4, 80], strides = [1, 1]} : vector<4x100xf32> to vector<4x80xf32>
    %c0_207 = arith.constant 0 : index
    %c1_208 = arith.constant 1 : index
    %c0_209 = arith.constant 0 : index
    %c11_210 = arith.constant 11 : index
    %144 = vector.load %arg1[%c0_207, %c1_208, %c0_209, %c11_210] : memref<1x4x4x120xf32, #tpu.memory_space<vmem>>, vector<1x1x4x80xf32>
    %145 = vector.shape_cast %144 : vector<1x1x4x80xf32> to vector<4x80xf32>
    %146 = vector.extract_strided_slice %40 {offsets = [0, 10], sizes = [4, 80], strides = [1, 1]} : vector<4x100xf32> to vector<4x80xf32>
    %c0_211 = arith.constant 0 : index
    %c3_212 = arith.constant 3 : index
    %c0_213 = arith.constant 0 : index
    %c10_214 = arith.constant 10 : index
    %147 = vector.load %arg1[%c0_211, %c3_212, %c0_213, %c10_214] : memref<1x4x4x120xf32, #tpu.memory_space<vmem>>, vector<1x1x4x80xf32>
    %148 = vector.shape_cast %147 : vector<1x1x4x80xf32> to vector<4x80xf32>
    %149 = vector.extract_strided_slice %69 {offsets = [0, 10], sizes = [4, 80], strides = [1, 1]} : vector<4x100xf32> to vector<4x80xf32>
    %c0_215 = arith.constant 0 : index
    %c2_216 = arith.constant 2 : index
    %c0_217 = arith.constant 0 : index
    %c11_218 = arith.constant 11 : index
    %150 = vector.load %arg1[%c0_215, %c2_216, %c0_217, %c11_218] : memref<1x4x4x120xf32, #tpu.memory_space<vmem>>, vector<1x1x4x80xf32>
    %151 = vector.shape_cast %150 : vector<1x1x4x80xf32> to vector<4x80xf32>
    %152 = vector.extract_strided_slice %40 {offsets = [0, 11], sizes = [4, 80], strides = [1, 1]} : vector<4x100xf32> to vector<4x80xf32>
    %c0_219 = arith.constant 0 : index
    %c3_220 = arith.constant 3 : index
    %c0_221 = arith.constant 0 : index
    %c11_222 = arith.constant 11 : index
    %153 = vector.load %arg1[%c0_219, %c3_220, %c0_221, %c11_222] : memref<1x4x4x120xf32, #tpu.memory_space<vmem>>, vector<1x1x4x80xf32>
    %154 = vector.shape_cast %153 : vector<1x1x4x80xf32> to vector<4x80xf32>
    %155 = tpu.concatenate %128, %131, %134, %137, %140, %143, %146, %149, %152 in 0 : vector<4x80xf32>, vector<4x80xf32>, vector<4x80xf32>, vector<4x80xf32>, vector<4x80xf32>, vector<4x80xf32>, vector<4x80xf32>, vector<4x80xf32>, vector<4x80xf32> -> vector<36x80xf32>
    %156 = tpu.concatenate %130, %133, %136, %139, %142, %145, %148, %151, %154 in 0 : vector<4x80xf32>, vector<4x80xf32>, vector<4x80xf32>, vector<4x80xf32>, vector<4x80xf32>, vector<4x80xf32>, vector<4x80xf32>, vector<4x80xf32>, vector<4x80xf32> -> vector<36x80xf32>
    %cst_223 = arith.constant dense<0.000000e+00> : vector<4x80xf32>
    %157 = tpu.matmul %3, %155, %cst_223 {dimension_numbers = #tpu.dot_dimension_numbers<[1], [0], [0], [1], [0, 0, 1, 1], [], []>} : vector<4x36xf32>, vector<36x80xf32>, vector<4x80xf32> -> vector<4x80xf32>
    %158 = vector.broadcast %9 : vector<4x1xf32> to vector<4x80xf32>
    %159 = arith.addf %157, %158 : vector<4x80xf32>
    %cst_224 = arith.constant dense<0.000000e+00> : vector<4x80xf32>
    %160 = tpu.matmul %5, %156, %cst_224 {dimension_numbers = #tpu.dot_dimension_numbers<[1], [0], [0], [1], [0, 0, 1, 1], [], []>} : vector<4x36xf32>, vector<36x80xf32>, vector<4x80xf32> -> vector<4x80xf32>
    %161 = vector.broadcast %11 : vector<4x1xf32> to vector<4x80xf32>
    %162 = arith.addf %160, %161 : vector<4x80xf32>
    %c0_225 = arith.constant 0 : index
    %c0_226 = arith.constant 0 : index
    %c0_227 = arith.constant 0 : index
    %163 = vector.load %arg6[%c0_225, %c0_226, %c0_227] : memref<1x4x80xf32, #tpu.memory_space<vmem>>, vector<1x4x80xf32>
    %164 = vector.shape_cast %163 : vector<1x4x80xf32> to vector<4x80xf32>
    %165 = vector.shape_cast %159 : vector<4x80xf32> to vector<1x4x80xf32>
    tpu.vector_store %arg6[%c0_225, %c0_226, %c0_227], %165 {strides = array<i32>} : memref<1x4x80xf32, #tpu.memory_space<vmem>>, vector<1x4x80xf32>,
    %c0_228 = arith.constant 0 : index
    %c0_229 = arith.constant 0 : index
    %c0_230 = arith.constant 0 : index
    %166 = vector.load %arg7[%c0_228, %c0_229, %c0_230] : memref<1x4x80xf32, #tpu.memory_space<vmem>>, vector<1x4x80xf32>
    %167 = vector.shape_cast %166 : vector<1x4x80xf32> to vector<4x80xf32>
    %168 = vector.shape_cast %162 : vector<4x80xf32> to vector<1x4x80xf32>
    tpu.vector_store %arg7[%c0_228, %c0_229, %c0_230], %168 {strides = array<i32>} : memref<1x4x80xf32, #tpu.memory_space<vmem>>, vector<1x4x80xf32>,
    return
  }
  func.func @transform_0(%arg0: i32) -> (i32, i32, i32, i32) {
    %c0_i32 = arith.constant 0 : i32
    %c0_i32_0 = arith.constant 0 : i32
    %c0_i32_1 = arith.constant 0 : i32
    %c0_i32_2 = arith.constant 0 : i32
    return %arg0, %c0_i32, %c0_i32_0, %c0_i32_1 : i32, i32, i32, i32
  }
  func.func @transform_1(%arg0: i32) -> (i32, i32, i32, i32) {
    %c0_i32 = arith.constant 0 : i32
    %c0_i32_0 = arith.constant 0 : i32
    %c0_i32_1 = arith.constant 0 : i32
    %c0_i32_2 = arith.constant 0 : i32
    return %arg0, %c0_i32, %c0_i32_0, %c0_i32_1 : i32, i32, i32, i32
  }
  func.func @transform_2(%arg0: i32) -> (i32, i32, i32) {
    %c0_i32 = arith.constant 0 : i32
    %c0_i32_0 = arith.constant 0 : i32
    %c0_i32_1 = arith.constant 0 : i32
    %c0_i32_2 = arith.constant 0 : i32
    return %c0_i32, %c0_i32_0, %c0_i32_1 : i32, i32, i32
  }
  func.func @transform_3(%arg0: i32) -> (i32, i32, i32) {
    %c0_i32 = arith.constant 0 : i32
    %c0_i32_0 = arith.constant 0 : i32
    %c0_i32_1 = arith.constant 0 : i32
    %c0_i32_2 = arith.constant 0 : i32
    return %c0_i32, %c0_i32_0, %c0_i32_1 : i32, i32, i32
  }
  func.func @transform_4(%arg0: i32) -> (i32, i32, i32) {
    %c0_i32 = arith.constant 0 : i32
    %c0_i32_0 = arith.constant 0 : i32
    %c0_i32_1 = arith.constant 0 : i32
    %c0_i32_2 = arith.constant 0 : i32
    return %c0_i32, %c0_i32_0, %c0_i32_1 : i32, i32, i32
  }
  func.func @transform_5(%arg0: i32) -> (i32, i32, i32) {
    %c0_i32 = arith.constant 0 : i32
    %c0_i32_0 = arith.constant 0 : i32
    %c0_i32_1 = arith.constant 0 : i32
    return %arg0, %c0_i32, %c0_i32_0 : i32, i32, i32
  }
  func.func @transform_6(%arg0: i32) -> (i32, i32, i32) {
    %c0_i32 = arith.constant 0 : i32
    %c0_i32_0 = arith.constant 0 : i32
    %c0_i32_1 = arith.constant 0 : i32
    return %arg0, %c0_i32, %c0_i32_0 : i32, i32, i32
  }
}

</mosaic_0001>

<llo_original>
// kernel: _restrict_forward.1
$region0: #{_restrict_forward.1}
  #allocation0 [shape = 'u32[]', space=smem, size = 0x4, offset = 0x4, fixed_abs, tag = 'smem constant byte address 0x4 - core index']
  #allocation1 [shape = 'u32[144,128]{1,0:T(1,128)}', space=vmem, size = 0x12000, scoped, tag = 'internal scratch']
  %s0 = inlined_call_operand.vmem [shape: f32[2,4,4,120], index: 0, kind: input, shape index: {}]
  %s1 = inlined_call_operand.vmem [shape: f32[2,4,4,100], index: 1, kind: input, shape index: {}]
  %s2 = inlined_call_operand.vmem [shape: f32[4,1,100], index: 2, kind: input, shape index: {}]
  %s3 = inlined_call_operand.vmem [shape: f32[3,4,36], index: 3, kind: input, shape index: {}]
  %s4 = inlined_call_operand.vmem [shape: f32[3,4,1], index: 4, kind: input, shape index: {}]
  %s5 = inlined_call_operand.vmem [shape: f32[2,4,80], index: 5, kind: output, shape index: {0}]
  %s6 = inlined_call_operand.vmem [shape: f32[2,4,80], index: 6, kind: output, shape index: {1}]
  %7 = xla_tuple %s5, %s6
  %s8 = sld [smem:[#allocation0]]
  $region61: #{_restrict_forward.1} parent=0
    _
  %s10 = ssub.s32 1, %s8
  %s11 = scalar_select 0, %s10, %s8
  loop: start=0, step=1, limit=4
  $region2: #{_restrict_forward.1} parent=0 // loop_pre_header
    _
  $region3: #{_restrict_forward.1} parent=0 // loop_header
    %s13 = sphi 0, %s17
    %p14 = scmp.ge.s32.totalorder %s13, 4
    %s23 = sphi 0, %s25
    %s26 = sphi 0, %s23
    %s27 = sphi 0, %s26
    %s43 = sphi 0, %s27
    %s49 = sphi 0, %s51
    %s52 = sphi 0, %s49
    %s53 = sphi 0, %s52
    %s69 = sphi 0, %s53
    %s73 = sphi 0, %s73
    %s75 = sphi 0, %s73
    %s76 = sphi 0, %s75
    %s90 = sphi 0, %s76
    %s94 = sphi 0, %s94
    %s96 = sphi 0, %s94
    %s97 = sphi 0, %s96
    %s111 = sphi 0, %s97
    %s115 = sphi 0, %s115
    %s117 = sphi 0, %s115
    %s118 = sphi 0, %s117
    %s132 = sphi 0, %s118
    %s138 = sphi 0, %s140
    %s141 = sphi 0, %s138
    %s142 = sphi 0, %s141
    %s158 = sphi 0, %s142
    %s164 = sphi 0, %s166
    %s167 = sphi 0, %s164
    %s168 = sphi 0, %s167
    %s184 = sphi 0, %s168
  $region4: #{_restrict_forward.1} parent=0 // loop_header_branch
    %16 = sbr.rel (%p14) target = $region8
  $region5: #{_restrict_forward.1} parent=0 // loop_body
    %s18 = ssub.s32 %s13, 1
    %s19 = ssub.s32 %s13, 2
    %s20 = sadd.s32 %s13, 1
    %s21 = ssub.s32 %s13, %s20
    %p22 = scmp.eq.s32.totalorder %s21, 0
    %s24 = sadd.s32 %s23, 1
    %s25 = scalar_select %p22, %s23, %s24
    %p28 = pneg %p22
    %p29 = scmp.eq.s32.totalorder %s13, 1
    %p30 = por %p28, %p29
    %p31 = scmp.ne.s32.totalorder %s23, %s26
    %p32 = scmp.eq.s32.totalorder %s13, 0
    %p33 = por %p31, %p32
    %p34 = scmp.ne.s32.totalorder %s23, %s26
    %p35 = scmp.eq.s32.totalorder %s18, 1
    %p36 = por %p34, %p35
    %p37 = scmp.ne.s32.totalorder %s26, %s27
    %p38 = scmp.eq.s32.totalorder %s18, 0
    %p39 = por %p37, %p38
    %p40 = scmp.ne.s32.totalorder %s26, %s27
    %p41 = scmp.eq.s32.totalorder %s19, 1
    %p42 = por %p40, %p41
    %p44 = scmp.ne.s32.totalorder %s27, %s43
    %p45 = scmp.eq.s32.totalorder %s19, 0
    %p46 = por %p44, %p45
    %s47 = ssub.s32 %s13, %s20
    %p48 = scmp.eq.s32.totalorder %s47, 0
    %s50 = sadd.s32 %s49, 1
    %s51 = scalar_select %p48, %s49, %s50
    %p54 = pneg %p48
    %p55 = scmp.eq.s32.totalorder %s13, 1
    %p56 = por %p54, %p55
    %p57 = scmp.ne.s32.totalorder %s49, %s52
    %p58 = scmp.eq.s32.totalorder %s13, 0
    %p59 = por %p57, %p58
    %p60 = scmp.ne.s32.totalorder %s49, %s52
    %p61 = scmp.eq.s32.totalorder %s18, 1
    %p62 = por %p60, %p61
    %p63 = scmp.ne.s32.totalorder %s52, %s53
    %p64 = scmp.eq.s32.totalorder %s18, 0
    %p65 = por %p63, %p64
    %p66 = scmp.ne.s32.totalorder %s52, %s53
    %p67 = scmp.eq.s32.totalorder %s19, 1
    %p68 = por %p66, %p67
    %p70 = scmp.ne.s32.totalorder %s53, %s69
    %p71 = scmp.eq.s32.totalorder %s19, 0
    %p72 = por %p70, %p71
    %s74 = sadd.s32 %s73, 1
    %p77 = scmp.eq.s32.totalorder %s13, 1
    %p78 = scmp.ne.s32.totalorder %s73, %s75
    %p79 = scmp.eq.s32.totalorder %s13, 0
    %p80 = por %p78, %p79
    %p81 = scmp.ne.s32.totalorder %s73, %s75
    %p82 = scmp.eq.s32.totalorder %s18, 1
    %p83 = por %p81, %p82
    %p84 = scmp.ne.s32.totalorder %s75, %s76
    %p85 = scmp.eq.s32.totalorder %s18, 0
    %p86 = por %p84, %p85
    %p87 = scmp.ne.s32.totalorder %s75, %s76
    %p88 = scmp.eq.s32.totalorder %s19, 1
    %p89 = por %p87, %p88
    %p91 = scmp.ne.s32.totalorder %s76, %s90
    %p92 = scmp.eq.s32.totalorder %s19, 0
    %p93 = por %p91, %p92
    %s95 = sadd.s32 %s94, 1
    %p98 = scmp.eq.s32.totalorder %s13, 1
    %p99 = scmp.ne.s32.totalorder %s94, %s96
    %p100 = scmp.eq.s32.totalorder %s13, 0
    %p101 = por %p99, %p100
    %p102 = scmp.ne.s32.totalorder %s94, %s96
    %p103 = scmp.eq.s32.totalorder %s18, 1
    %p104 = por %p102, %p103
    %p105 = scmp.ne.s32.totalorder %s96, %s97
    %p106 = scmp.eq.s32.totalorder %s18, 0
    %p107 = por %p105, %p106
    %p108 = scmp.ne.s32.totalorder %s96, %s97
    %p109 = scmp.eq.s32.totalorder %s19, 1
    %p110 = por %p108, %p109
    %p112 = scmp.ne.s32.totalorder %s97, %s111
    %p113 = scmp.eq.s32.totalorder %s19, 0
    %p114 = por %p112, %p113
    %s116 = sadd.s32 %s115, 1
    %p119 = scmp.eq.s32.totalorder %s13, 1
    %p120 = scmp.ne.s32.totalorder %s115, %s117
    %p121 = scmp.eq.s32.totalorder %s13, 0
    %p122 = por %p120, %p121
    %p123 = scmp.ne.s32.totalorder %s115, %s117
    %p124 = scmp.eq.s32.totalorder %s18, 1
    %p125 = por %p123, %p124
    %p126 = scmp.ne.s32.totalorder %s117, %s118
    %p127 = scmp.eq.s32.totalorder %s18, 0
    %p128 = por %p126, %p127
    %p129 = scmp.ne.s32.totalorder %s117, %s118
    %p130 = scmp.eq.s32.totalorder %s19, 1
    %p131 = por %p129, %p130
    %p133 = scmp.ne.s32.totalorder %s118, %s132
    %p134 = scmp.eq.s32.totalorder %s19, 0
    %p135 = por %p133, %p134
    %s136 = ssub.s32 %s13, %s20
    %p137 = scmp.eq.s32.totalorder %s136, 0
    %s139 = sadd.s32 %s138, 1
    %s140 = scalar_select %p137, %s138, %s139
    %p143 = pneg %p137
    %p144 = scmp.eq.s32.totalorder %s13, 1
    %p145 = por %p143, %p144
    %p146 = scmp.ne.s32.totalorder %s138, %s141
    %p147 = scmp.eq.s32.totalorder %s13, 0
    %p148 = por %p146, %p147
    %p149 = scmp.ne.s32.totalorder %s138, %s141
    %p150 = scmp.eq.s32.totalorder %s18, 1
    %p151 = por %p149, %p150
    %p152 = scmp.ne.s32.totalorder %s141, %s142
    %p153 = scmp.eq.s32.totalorder %s18, 0
    %p154 = por %p152, %p153
    %p155 = scmp.ne.s32.totalorder %s141, %s142
    %p156 = scmp.eq.s32.totalorder %s19, 1
    %p157 = por %p155, %p156
    %p159 = scmp.ne.s32.totalorder %s142, %s158
    %p160 = scmp.eq.s32.totalorder %s19, 0
    %p161 = por %p159, %p160
    %s162 = ssub.s32 %s13, %s20
    %p163 = scmp.eq.s32.totalorder %s162, 0
    %s165 = sadd.s32 %s164, 1
    %s166 = scalar_select %p163, %s164, %s165
    %p169 = pneg %p163
    %p170 = scmp.eq.s32.totalorder %s13, 1
    %p171 = por %p169, %p170
    %p172 = scmp.ne.s32.totalorder %s164, %s167
    %p173 = scmp.eq.s32.totalorder %s13, 0
    %p174 = por %p172, %p173
    %p175 = scmp.ne.s32.totalorder %s164, %s167
    %p176 = scmp.eq.s32.totalorder %s18, 1
    %p177 = por %p175, %p176
    %p178 = scmp.ne.s32.totalorder %s167, %s168
    %p179 = scmp.eq.s32.totalorder %s18, 0
    %p180 = por %p178, %p179
    %p181 = scmp.ne.s32.totalorder %s167, %s168
    %p182 = scmp.eq.s32.totalorder %s19, 1
    %p183 = por %p181, %p182
    %p185 = scmp.ne.s32.totalorder %s168, %s184
    %p186 = scmp.eq.s32.totalorder %s19, 0
    %p187 = por %p185, %p186
    %p188 = scmp.le.s32.totalorder 1, %s13
    %p189 = scmp.lt.s32.totalorder %s13, 3
    %p190 = pnand %p188, %p189
    %p191 = pneg %p190
    // Predicated region
    $region9: #{_restrict_forward.1} parent=5 // pred_check
      _
    $region10: #{_restrict_forward.1} parent=5 // pred_check_branch
      %193 = sbr.rel (%p190) target = $region12
    $region11: #{_restrict_forward.1} parent=5 // pred_region
      %s194 = ssub.s32 %s13, 1
      // Predicated region
      $region13: #{_restrict_forward.1} parent=11 // pred_check
        %p195 = pneg %p86
      $region14: #{_restrict_forward.1} parent=11 // pred_check_branch
        %197 = sbr.rel (%p195) target = $region16
      $region15: #{_restrict_forward.1} parent=11 // pred_region
        _
      $region16: #{_restrict_forward.1} parent=11 // pred_fallthru
        _
      // Predicated region
      $region17: #{_restrict_forward.1} parent=11 // pred_check
        %p198 = pneg %p107
      $region18: #{_restrict_forward.1} parent=11 // pred_check_branch
        %200 = sbr.rel (%p198) target = $region20
      $region19: #{_restrict_forward.1} parent=11 // pred_region
        _
      $region20: #{_restrict_forward.1} parent=11 // pred_fallthru
        _
      // Predicated region
      $region21: #{_restrict_forward.1} parent=11 // pred_check
        %p201 = pneg %p128
      $region22: #{_restrict_forward.1} parent=11 // pred_check_branch
        %203 = sbr.rel (%p201) target = $region24
      $region23: #{_restrict_forward.1} parent=11 // pred_region
        _
      $region24: #{_restrict_forward.1} parent=11 // pred_fallthru
        _
    $region12: #{_restrict_forward.1} parent=5 // pred_fallthru
      _
    %p204 = scmp.lt.s32.totalorder %s13, 2
    // Predicated region
    $region25: #{_restrict_forward.1} parent=5 // pred_check
      %p205 = pneg %p204
    $region26: #{_restrict_forward.1} parent=5 // pred_check_branch
      %207 = sbr.rel (%p205) target = $region28
    $region27: #{_restrict_forward.1} parent=5 // pred_region
      // Predicated region
      $region29: #{_restrict_forward.1} parent=27 // pred_check
        %p208 = pneg %p33
      $region30: #{_restrict_forward.1} parent=27 // pred_check_branch
        %210 = sbr.rel (%p208) target = $region32
      $region31: #{_restrict_forward.1} parent=27 // pred_region
        %p211 = scmp.lt.s32.totalorder %s13, 1
        %s212 = scalar_select %p211, %s13, 1
        %s213 = smul.addr %s212, 4
        %s214 = smul.addr %s213, 4
        %s215 = scalar_lea.vmem %s0, %s214
      $region32: #{_restrict_forward.1} parent=27 // pred_fallthru
        _
      // Predicated region
      $region33: #{_restrict_forward.1} parent=27 // pred_check
        %p216 = pneg %p59
      $region34: #{_restrict_forward.1} parent=27 // pred_check_branch
        %218 = sbr.rel (%p216) target = $region36
      $region35: #{_restrict_forward.1} parent=27 // pred_region
        %p219 = scmp.lt.s32.totalorder %s13, 1
        %s220 = scalar_select %p219, %s13, 1
        %s221 = smul.addr %s220, 4
        %s222 = smul.addr %s221, 4
        %s223 = scalar_lea.vmem %s1, %s222
      $region36: #{_restrict_forward.1} parent=27 // pred_fallthru
        _
    $region28: #{_restrict_forward.1} parent=5 // pred_fallthru
      _
    %p224 = scmp.le.s32.totalorder 1, %s13
    %p225 = scmp.lt.s32.totalorder %s13, 3
    %p226 = pnand %p224, %p225
    %p227 = pneg %p226
    // Predicated region
    $region37: #{_restrict_forward.1} parent=5 // pred_check
      _
    $region38: #{_restrict_forward.1} parent=5 // pred_check_branch
      %229 = sbr.rel (%p226) target = $region40
    $region39: #{_restrict_forward.1} parent=5 // pred_region
      %s230 = ssub.s32 %s13, 1
      %p231 = scmp.lt.s32.totalorder %s18, 1
      %s232 = scalar_select %p231, %s18, 1
      %s233 = smul.addr %s232, 4
      %s234 = smul.addr %s233, 4
      %s235 = scalar_lea.vmem %s0, %s234
      %p236 = pneg %p39
      %p237 = pneg %p36
      %p238 = scmp.lt.s32.totalorder %s18, 1
      %s239 = scalar_select %p238, %s18, 1
      %s240 = smul.addr %s239, 4
      %s241 = smul.addr %s240, 4
      %s242 = scalar_lea.vmem %s1, %s241
      %p243 = pneg %p65
      %p244 = pneg %p62
      %p245 = pneg %p86
      %p246 = pneg %p83
      %p247 = pneg %p107
      %p248 = pneg %p104
      %p249 = pneg %p128
      %p250 = pneg %p125
      %p251 = pneg %p154
      %p252 = pneg %p151
      %p253 = scmp.lt.s32.totalorder %s18, 1
      %s254 = scalar_select %p253, %s18, 1
      %s255 = smul.addr %s254, 4
      %s256 = scalar_lea.vmem %s5, %s255
      %p257 = pneg %p180
      %p258 = pneg %p177
      %p259 = scmp.lt.s32.totalorder %s18, 1
      %s260 = scalar_select %p259, %s18, 1
      %s261 = smul.addr %s260, 4
      %s262 = scalar_lea.vmem %s6, %s261
      %p263 = scmp.lt.s32.totalorder %s18, 1
      %s264 = scalar_select %p263, %s18, 1
      %s265 = smul.addr %s264, 4
      %s266 = smul.addr %s265, 4
      %s267 = scalar_lea.vmem %s0, %s266
      %p268 = scmp.lt.s32.totalorder %s18, 1
      %s269 = scalar_select %p268, %s18, 1
      %s270 = smul.addr %s269, 4
      %s271 = smul.addr %s270, 4
      %s272 = scalar_lea.vmem %s1, %s271
      %p273 = scmp.lt.s32.totalorder %s18, 1
      %s274 = scalar_select %p273, %s18, 1
      %s275 = smul.addr %s274, 4
      %s276 = scalar_lea.vmem %s5, %s275
      %p277 = scmp.lt.s32.totalorder %s18, 1
      %s278 = scalar_select %p277, %s18, 1
      %s279 = smul.addr %s278, 4
      %s280 = scalar_lea.vmem %s6, %s279
      %v281 = vld [vmem:[%s3] sm:$0xf]
      %s282 = scalar_lea.vmem %s3, 4
      %v283 = vld [vmem:[%s282] sm:$0xf]
      %s284 = scalar_lea.vmem %s3, 8
      %v285 = vld [vmem:[%s284] sm:$0xf]
      %v286 = vld [vmem:[%s4] sm:$0xf]
      %s287 = scalar_lea.vmem %s4, 4
      %v288 = vld [vmem:[%s287] sm:$0xf]
      %s289 = scalar_lea.vmem %s4, 8
      %v290 = vld [vmem:[%s289] sm:$0xf]
      %v291 = vld [vmem:[%s267] sm:$0xf]
      %s292 = scalar_lea.vmem %s267, 4
      %v293 = vld [vmem:[%s292] sm:$0xf]
      %s294 = scalar_lea.vmem %s267, 8
      %v295 = vld [vmem:[%s294] sm:$0xf]
      %s296 = scalar_lea.vmem %s267, 12
      %v297 = vld [vmem:[%s296] sm:$0xf]
      %v299 = vrot.slane %v293, 4
      %302 = vrot.lane.b32.xlu0 %v291, 127
      %v303 = vpop.permute.xlu0 %302
      %v306 = vrot.slane %v295, 4
      %308 = vrot.lane.b32.xlu0 %v306, 127
      %v309 = vpop.permute.xlu0 %308
      %311 = vrot.lane.b32.xlu0 %v291, 118
      %v312 = vpop.permute.xlu0 %311
      %314 = vrot.lane.b32.xlu0 %v299, 118
      %v315 = vpop.permute.xlu0 %314
      %317 = vrot.lane.b32.xlu0 %v291, 117
      %v318 = vpop.permute.xlu0 %317
      %vm319 = vcmask 1043456
      %v320 = vsel %vm319, %v291, %v299
      %v321 = vsel %vm319, %v303, %v306
      %v322 = vsel %vm319, %v297, %v309
      %v323 = vsel %vm319, %v312, %v315
      %vm324 = vcmask 293888
      %v326 = vsel %vm324, %v281, 0
      %v328 = vsel %vm319, %v318, 0
      %330 = vmatprep.subr.mxu0 0.0
      %331 = vmatpush1.msra.mxu0 0.0
      %332 = vmatprep.subr.mxu0 0.0
      %333 = vmatpush1.msra.mxu0 0.0
      %334 = vmatprep.subr.mxu0 0.0
      %335 = vmatpush1.msra.mxu0 0.0
      %336 = vmatprep.subr.mxu0 0.0
      %337 = vmatpush1.msra.mxu0 0.0
      %338 = vmatprep.subr.mxu0 0.0
      %339 = vmatpush1.msra.mxu0 0.0
      %340 = vmatprep.subr.mxu0 0.0
      %341 = vmatpush1.msra.mxu0 0.0
      %342 = vmatprep.subr.mxu0 0.0
      %343 = vmatpush1.msra.mxu0 0.0
      %344 = vmatprep.subr.mxu0 0.0
      %345 = vmatpush1.msra.mxu0 0.0
      %346 = vmatprep.subr.mxu0 0.0
      %347 = vmatpush1.msra.mxu0 0.0
      %348 = vmatprep.subr.mxu0 0.0
      %349 = vmatpush1.msra.mxu0 0.0
      %350 = vmatprep.subr.mxu0 0.0
      %351 = vmatpush1.msra.mxu0 0.0
      %352 = vmatprep.subr.mxu0 0.0
      %353 = vmatpush1.msra.mxu0 %v328
      %354 = vmatprep.subr.mxu0 0.0
      %355 = vmatpush1.msra.mxu0 %v323
      %356 = vmatprep.subr.mxu0 0.0
      %357 = vmatpush1.msra.mxu0 %v322
      %358 = vmatprep.subr.mxu0 0.0
      %359 = vmatpush1.msra.mxu0 %v321
      %360 = vmatprep.subr.mxu0 0.0
      %361 = vmatpush1.msra.mxu0 %v320
      %362 = vmatprep.subr.mxu0 0.0
      %363 = vmatpush2.msra.mxu0 0.0
      %364 = vmatprep.subr.mxu0 0.0
      %365 = vmatpush2.msra.mxu0 0.0
      %366 = vmatprep.subr.mxu0 0.0
      %367 = vmatpush2.msra.mxu0 0.0
      %368 = vmatprep.subr.mxu0 0.0
      %369 = vmatpush2.msra.mxu0 0.0
      %370 = vmatprep.subr.mxu0 0.0
      %371 = vmatpush2.msra.mxu0 0.0
      %372 = vmatprep.subr.mxu0 0.0
      %373 = vmatpush2.msra.mxu0 0.0
      %374 = vmatprep.subr.mxu0 0.0
      %375 = vmatpush2.msra.mxu0 0.0
      %376 = vmatprep.subr.mxu0 0.0
      %377 = vmatpush2.msra.mxu0 0.0
      %378 = vmatprep.subr.mxu0 0.0
      %379 = vmatpush2.msra.mxu0 0.0
      %380 = vmatprep.subr.mxu0 0.0
      %381 = vmatpush2.msra.mxu0 0.0
      %382 = vmatprep.subr.mxu0 0.0
      %383 = vmatpush2.msra.mxu0 0.0
      %384 = vmatprep.subr.mxu0 0.0
      %385 = vmatpush2.msra.mxu0 0.0
      %386 = vmatprep.subr.mxu0 0.0
      %387 = vmatpush2.msra.mxu0 0.0
      %388 = vmatprep.subr.mxu0 0.0
      %389 = vmatpush2.msra.mxu0 0.0
      %390 = vmatprep.subr.mxu0 0.0
      %391 = vmatpush2.msra.mxu0 0.0
      %392 = vmatprep.subr.mxu0 0.0
      %393 = vmatpush2.msra.mxu0 0.0
      %394 = vmatprep.mubr.f32.mxu0 0.0
      %395 = vmatmul.mubr.f32.gmra.mxu0 %v326
      %v396 = vpop.f32.mrf.mxu0
      %v397 = vadd.f32 0.0, %v396
      %v398 = vpop.f32.mrf.mxu0
      %399 = vdwg.mxu0
      %v400 = vld [vmem:[%s272] sm:$0xf]
      %v401 = vld [vmem:[%s2] sm:$0x1]
      %v402 = vsub.f32 %v400, %v397
      %404 = vset.pattern.permute.xlu0 0
      %405 = vperm.xlu0 %404, %v286
      %v406 = vpop.permute.xlu0 %405
      %v408 = vsub.f32 %v402, %v406
      %v410 = vlaneseq
      %v411 = vshrl.u32 %v410, 7
      %v412 = vsub.s32 0, %v411
      %v413 = vrot.slane %v401, %v412
      %v415 = vmul.f32 %v408, %v413
      %v416 = vrot.slane %v291, 4
      %417 = vrot.lane.b32.xlu0 %v416, 127
      %v418 = vpop.permute.xlu0 %417
      %420 = vrot.lane.b32.xlu0 %v293, 127
      %v421 = vpop.permute.xlu0 %420
      %v424 = vrot.slane %v297, 4
      %426 = vrot.lane.b32.xlu0 %v295, 127
      %v427 = vpop.permute.xlu0 %426
      %429 = vrot.lane.b32.xlu0 %v424, 127
      %v430 = vpop.permute.xlu0 %429
      %432 = vrot.lane.b32.xlu0 %v293, 118
      %v433 = vpop.permute.xlu0 %432
      %435 = vrot.lane.b32.xlu0 %v416, 117
      %v436 = vpop.permute.xlu0 %435
      %438 = vrot.lane.b32.xlu0 %v293, 117
      %v439 = vpop.permute.xlu0 %438
      %v440 = vsel %vm319, %v293, %v418
      %v441 = vsel %vm319, %v421, %v424
      %v442 = vsel %vm319, %v427, %v430
      %v443 = vsel %vm319, %v433, %v436
      %v444 = vsel %vm319, %v439, 0
      %446 = vmatprep.subr.mxu0 0.0
      %447 = vmatpush1.msra.mxu0 0.0
      %448 = vmatprep.subr.mxu0 0.0
      %449 = vmatpush1.msra.mxu0 0.0
      %450 = vmatprep.subr.mxu0 0.0
      %451 = vmatpush1.msra.mxu0 0.0
      %452 = vmatprep.subr.mxu0 0.0
      %453 = vmatpush1.msra.mxu0 0.0
      %454 = vmatprep.subr.mxu0 0.0
      %455 = vmatpush1.msra.mxu0 0.0
      %456 = vmatprep.subr.mxu0 0.0
      %457 = vmatpush1.msra.mxu0 0.0
      %458 = vmatprep.subr.mxu0 0.0
      %459 = vmatpush1.msra.mxu0 0.0
      %460 = vmatprep.subr.mxu0 0.0
      %461 = vmatpush1.msra.mxu0 0.0
      %462 = vmatprep.subr.mxu0 0.0
      %463 = vmatpush1.msra.mxu0 0.0
      %464 = vmatprep.subr.mxu0 0.0
      %465 = vmatpush1.msra.mxu0 0.0
      %466 = vmatprep.subr.mxu0 0.0
      %467 = vmatpush1.msra.mxu0 0.0
      %468 = vmatprep.subr.mxu0 0.0
      %469 = vmatpush1.msra.mxu0 %v444
      %470 = vmatprep.subr.mxu0 0.0
      %471 = vmatpush1.msra.mxu0 %v443
      %472 = vmatprep.subr.mxu0 0.0
      %473 = vmatpush1.msra.mxu0 %v442
      %474 = vmatprep.subr.mxu0 0.0
      %475 = vmatpush1.msra.mxu0 %v441
      %476 = vmatprep.subr.mxu0 0.0
      %477 = vmatpush1.msra.mxu0 %v440
      %478 = vmatprep.subr.mxu0 0.0
      %479 = vmatpush2.msra.mxu0 0.0
      %480 = vmatprep.subr.mxu0 0.0
      %481 = vmatpush2.msra.mxu0 0.0
      %482 = vmatprep.subr.mxu0 0.0
      %483 = vmatpush2.msra.mxu0 0.0
      %484 = vmatprep.subr.mxu0 0.0
      %485 = vmatpush2.msra.mxu0 0.0
      %486 = vmatprep.subr.mxu0 0.0
      %487 = vmatpush2.msra.mxu0 0.0
      %488 = vmatprep.subr.mxu0 0.0
      %489 = vmatpush2.msra.mxu0 0.0
      %490 = vmatprep.subr.mxu0 0.0
      %491 = vmatpush2.msra.mxu0 0.0
      %492 = vmatprep.subr.mxu0 0.0
      %493 = vmatpush2.msra.mxu0 0.0
      %494 = vmatprep.subr.mxu0 0.0
      %495 = vmatpush2.msra.mxu0 0.0
      %496 = vmatprep.subr.mxu0 0.0
      %497 = vmatpush2.msra.mxu0 0.0
      %498 = vmatprep.subr.mxu0 0.0
      %499 = vmatpush2.msra.mxu0 0.0
      %500 = vmatprep.subr.mxu0 0.0
      %501 = vmatpush2.msra.mxu0 0.0
      %502 = vmatprep.subr.mxu0 0.0
      %503 = vmatpush2.msra.mxu0 0.0
      %504 = vmatprep.subr.mxu0 0.0
      %505 = vmatpush2.msra.mxu0 0.0
      %506 = vmatprep.subr.mxu0 0.0
      %507 = vmatpush2.msra.mxu0 0.0
      %508 = vmatprep.subr.mxu0 0.0
      %509 = vmatpush2.msra.mxu0 0.0
      %510 = vmatprep.mubr.f32.mxu0 0.0
      %511 = vmatmul.mubr.f32.gmra.mxu0 %v326
      %v512 = vpop.f32.mrf.mxu0
      %v513 = vadd.f32 0.0, %v512
      %v514 = vpop.f32.mrf.mxu0
      %515 = vdwg.mxu0
      %s516 = scalar_lea.vmem %s272, 4
      %v517 = vld [vmem:[%s516] sm:$0xf]
      %s518 = scalar_lea.vmem %s2, 1
      %v519 = vld [vmem:[%s518] sm:$0x1]
      %v520 = vsub.f32 %v517, %v513
      %v521 = vsub.f32 %v520, %v406
      %v523 = vlaneseq
      %v524 = vshrl.u32 %v523, 7
      %v525 = vsub.s32 0, %v524
      %v526 = vrot.slane %v519, %v525
      %v528 = vmul.f32 %v521, %v526
      %529 = vrot.lane.b32.xlu0 %v416, 118
      %v530 = vpop.permute.xlu0 %529
      %532 = vrot.lane.b32.xlu0 %v295, 118
      %v533 = vpop.permute.xlu0 %532
      %535 = vrot.lane.b32.xlu0 %v424, 118
      %v536 = vpop.permute.xlu0 %535
      %538 = vrot.lane.b32.xlu0 %v295, 117
      %v539 = vpop.permute.xlu0 %538
      %v540 = vsel %vm319, %v295, %v424
      %v541 = vsel %vm319, %v427, %v530
      %v542 = vsel %vm319, %v533, %v536
      %v543 = vsel %vm319, %v539, 0
      %545 = vmatprep.subr.mxu0 0.0
      %546 = vmatpush1.msra.mxu0 0.0
      %547 = vmatprep.subr.mxu0 0.0
      %548 = vmatpush1.msra.mxu0 0.0
      %549 = vmatprep.subr.mxu0 0.0
      %550 = vmatpush1.msra.mxu0 0.0
      %551 = vmatprep.subr.mxu0 0.0
      %552 = vmatpush1.msra.mxu0 0.0
      %553 = vmatprep.subr.mxu0 0.0
      %554 = vmatpush1.msra.mxu0 0.0
      %555 = vmatprep.subr.mxu0 0.0
      %556 = vmatpush1.msra.mxu0 0.0
      %557 = vmatprep.subr.mxu0 0.0
      %558 = vmatpush1.msra.mxu0 0.0
      %559 = vmatprep.subr.mxu0 0.0
      %560 = vmatpush1.msra.mxu0 0.0
      %561 = vmatprep.subr.mxu0 0.0
      %562 = vmatpush1.msra.mxu0 0.0
      %563 = vmatprep.subr.mxu0 0.0
      %564 = vmatpush1.msra.mxu0 0.0
      %565 = vmatprep.subr.mxu0 0.0
      %566 = vmatpush1.msra.mxu0 0.0
      %567 = vmatprep.subr.mxu0 0.0
      %568 = vmatpush1.msra.mxu0 %v543
      %569 = vmatprep.subr.mxu0 0.0
      %570 = vmatpush1.msra.mxu0 %v542
      %571 = vmatprep.subr.mxu0 0.0
      %572 = vmatpush1.msra.mxu0 %v443
      %573 = vmatprep.subr.mxu0 0.0
      %574 = vmatpush1.msra.mxu0 %v541
      %575 = vmatprep.subr.mxu0 0.0
      %576 = vmatpush1.msra.mxu0 %v540
      %577 = vmatprep.subr.mxu0 0.0
      %578 = vmatpush2.msra.mxu0 0.0
      %579 = vmatprep.subr.mxu0 0.0
      %580 = vmatpush2.msra.mxu0 0.0
      %581 = vmatprep.subr.mxu0 0.0
      %582 = vmatpush2.msra.mxu0 0.0
      %583 = vmatprep.subr.mxu0 0.0
      %584 = vmatpush2.msra.mxu0 0.0
      %585 = vmatprep.subr.mxu0 0.0
      %586 = vmatpush2.msra.mxu0 0.0
      %587 = vmatprep.subr.mxu0 0.0
      %588 = vmatpush2.msra.mxu0 0.0
      %589 = vmatprep.subr.mxu0 0.0
      %590 = vmatpush2.msra.mxu0 0.0
      %591 = vmatprep.subr.mxu0 0.0
      %592 = vmatpush2.msra.mxu0 0.0
      %593 = vmatprep.subr.mxu0 0.0
      %594 = vmatpush2.msra.mxu0 0.0
      %595 = vmatprep.subr.mxu0 0.0
      %596 = vmatpush2.msra.mxu0 0.0
      %597 = vmatprep.subr.mxu0 0.0
      %598 = vmatpush2.msra.mxu0 0.0
      %599 = vmatprep.subr.mxu0 0.0
      %600 = vmatpush2.msra.mxu0 0.0
      %601 = vmatprep.subr.mxu0 0.0
      %602 = vmatpush2.msra.mxu0 0.0
      %603 = vmatprep.subr.mxu0 0.0
      %604 = vmatpush2.msra.mxu0 0.0
      %605 = vmatprep.subr.mxu0 0.0
      %606 = vmatpush2.msra.mxu0 0.0
      %607 = vmatprep.subr.mxu0 0.0
      %608 = vmatpush2.msra.mxu0 0.0
      %609 = vmatprep.mubr.f32.mxu0 0.0
      %610 = vmatmul.mubr.f32.gmra.mxu0 %v326
      %v611 = vpop.f32.mrf.mxu0
      %v612 = vadd.f32 0.0, %v611
      %v613 = vpop.f32.mrf.mxu0
      %614 = vdwg.mxu0
      %s615 = scalar_lea.vmem %s272, 8
      %v616 = vld [vmem:[%s615] sm:$0xf]
      %s617 = scalar_lea.vmem %s2, 2
      %v618 = vld [vmem:[%s617] sm:$0x1]
      %v619 = vsub.f32 %v616, %v612
      %v620 = vsub.f32 %v619, %v406
      %v622 = vlaneseq
      %v623 = vshrl.u32 %v622, 7
      %v624 = vsub.s32 0, %v623
      %v625 = vrot.slane %v618, %v624
      %v627 = vmul.f32 %v620, %v625
      %628 = vrot.lane.b32.xlu0 %v297, 127
      %v629 = vpop.permute.xlu0 %628
      %632 = vrot.lane.b32.xlu0 %v299, 117
      %v633 = vpop.permute.xlu0 %632
      %635 = vrot.lane.b32.xlu0 %v297, 118
      %v636 = vpop.permute.xlu0 %635
      %638 = vrot.lane.b32.xlu0 %v306, 117
      %v639 = vpop.permute.xlu0 %638
      %641 = vrot.lane.b32.xlu0 %v297, 117
      %v642 = vpop.permute.xlu0 %641
      %v643 = vsel %vm319, %v629, %v315
      %v644 = vsel %vm319, %v318, %v633
      %v645 = vsel %vm319, %v636, %v639
      %v646 = vsel %vm319, %v642, 0
      %648 = vmatprep.subr.mxu0 0.0
      %649 = vmatpush1.msra.mxu0 0.0
      %650 = vmatprep.subr.mxu0 0.0
      %651 = vmatpush1.msra.mxu0 0.0
      %652 = vmatprep.subr.mxu0 0.0
      %653 = vmatpush1.msra.mxu0 0.0
      %654 = vmatprep.subr.mxu0 0.0
      %655 = vmatpush1.msra.mxu0 0.0
      %656 = vmatprep.subr.mxu0 0.0
      %657 = vmatpush1.msra.mxu0 0.0
      %658 = vmatprep.subr.mxu0 0.0
      %659 = vmatpush1.msra.mxu0 0.0
      %660 = vmatprep.subr.mxu0 0.0
      %661 = vmatpush1.msra.mxu0 0.0
      %662 = vmatprep.subr.mxu0 0.0
      %663 = vmatpush1.msra.mxu0 0.0
      %664 = vmatprep.subr.mxu0 0.0
      %665 = vmatpush1.msra.mxu0 0.0
      %666 = vmatprep.subr.mxu0 0.0
      %667 = vmatpush1.msra.mxu0 0.0
      %668 = vmatprep.subr.mxu0 0.0
      %669 = vmatpush1.msra.mxu0 0.0
      %670 = vmatprep.subr.mxu0 0.0
      %671 = vmatpush1.msra.mxu0 %v646
      %672 = vmatprep.subr.mxu0 0.0
      %673 = vmatpush1.msra.mxu0 %v645
      %674 = vmatprep.subr.mxu0 0.0
      %675 = vmatpush1.msra.mxu0 %v644
      %676 = vmatprep.subr.mxu0 0.0
      %677 = vmatpush1.msra.mxu0 %v643
      %678 = vmatprep.subr.mxu0 0.0
      %679 = vmatpush1.msra.mxu0 %v322
      %680 = vmatprep.subr.mxu0 0.0
      %681 = vmatpush2.msra.mxu0 0.0
      %682 = vmatprep.subr.mxu0 0.0
      %683 = vmatpush2.msra.mxu0 0.0
      %684 = vmatprep.subr.mxu0 0.0
      %685 = vmatpush2.msra.mxu0 0.0
      %686 = vmatprep.subr.mxu0 0.0
      %687 = vmatpush2.msra.mxu0 0.0
      %688 = vmatprep.subr.mxu0 0.0
      %689 = vmatpush2.msra.mxu0 0.0
      %690 = vmatprep.subr.mxu0 0.0
      %691 = vmatpush2.msra.mxu0 0.0
      %692 = vmatprep.subr.mxu0 0.0
      %693 = vmatpush2.msra.mxu0 0.0
      %694 = vmatprep.subr.mxu0 0.0
      %695 = vmatpush2.msra.mxu0 0.0
      %696 = vmatprep.subr.mxu0 0.0
      %697 = vmatpush2.msra.mxu0 0.0
      %698 = vmatprep.subr.mxu0 0.0
      %699 = vmatpush2.msra.mxu0 0.0
      %700 = vmatprep.subr.mxu0 0.0
      %701 = vmatpush2.msra.mxu0 0.0
      %702 = vmatprep.subr.mxu0 0.0
      %703 = vmatpush2.msra.mxu0 0.0
      %704 = vmatprep.subr.mxu0 0.0
      %705 = vmatpush2.msra.mxu0 0.0
      %706 = vmatprep.subr.mxu0 0.0
      %707 = vmatpush2.msra.mxu0 0.0
      %708 = vmatprep.subr.mxu0 0.0
      %709 = vmatpush2.msra.mxu0 0.0
      %710 = vmatprep.subr.mxu0 0.0
      %711 = vmatpush2.msra.mxu0 0.0
      %712 = vmatprep.mubr.f32.mxu0 0.0
      %713 = vmatmul.mubr.f32.gmra.mxu0 %v326
      %v714 = vpop.f32.mrf.mxu0
      %v715 = vadd.f32 0.0, %v714
      %v716 = vpop.f32.mrf.mxu0
      %717 = vdwg.mxu0
      %s718 = scalar_lea.vmem %s272, 12
      %v719 = vld [vmem:[%s718] sm:$0xf]
      %s720 = scalar_lea.vmem %s2, 3
      %v721 = vld [vmem:[%s720] sm:$0x1]
      %v722 = vsub.f32 %v719, %v715
      %v723 = vsub.f32 %v722, %v406
      %v725 = vlaneseq
      %v726 = vshrl.u32 %v725, 7
      %v727 = vsub.s32 0, %v726
      %v728 = vrot.slane %v721, %v727
      %v730 = vmul.f32 %v723, %v728
      %v732 = vrot.slane %v528, 4
      %735 = vrot.lane.b32.xlu0 %v415, 127
      %v736 = vpop.permute.xlu0 %735
      %v739 = vrot.slane %v627, 4
      %741 = vrot.lane.b32.xlu0 %v739, 127
      %v742 = vpop.permute.xlu0 %741
      %744 = vrot.lane.b32.xlu0 %v415, 118
      %v745 = vpop.permute.xlu0 %744
      %747 = vrot.lane.b32.xlu0 %v732, 118
      %v748 = vpop.permute.xlu0 %747
      %750 = vrot.lane.b32.xlu0 %v415, 117
      %v751 = vpop.permute.xlu0 %750
      %v752 = vsel %vm319, %v415, %v732
      %v753 = vsel %vm319, %v736, %v739
      %v754 = vsel %vm319, %v730, %v742
      %v755 = vsel %vm319, %v745, %v748
      %757 = vset.pattern.permute.xlu0 0
      %758 = vperm.xlu0 %757, %v288
      %v759 = vpop.permute.xlu0 %758
      %v762 = vsel %vm324, %v283, 0
      %v764 = vsel %vm319, %v751, 0
      %766 = vmatprep.subr.mxu0 0.0
      %767 = vmatpush1.msra.mxu0 0.0
      %768 = vmatprep.subr.mxu0 0.0
      %769 = vmatpush1.msra.mxu0 0.0
      %770 = vmatprep.subr.mxu0 0.0
      %771 = vmatpush1.msra.mxu0 0.0
      %772 = vmatprep.subr.mxu0 0.0
      %773 = vmatpush1.msra.mxu0 0.0
      %774 = vmatprep.subr.mxu0 0.0
      %775 = vmatpush1.msra.mxu0 0.0
      %776 = vmatprep.subr.mxu0 0.0
      %777 = vmatpush1.msra.mxu0 0.0
      %778 = vmatprep.subr.mxu0 0.0
      %779 = vmatpush1.msra.mxu0 0.0
      %780 = vmatprep.subr.mxu0 0.0
      %781 = vmatpush1.msra.mxu0 0.0
      %782 = vmatprep.subr.mxu0 0.0
      %783 = vmatpush1.msra.mxu0 0.0
      %784 = vmatprep.subr.mxu0 0.0
      %785 = vmatpush1.msra.mxu0 0.0
      %786 = vmatprep.subr.mxu0 0.0
      %787 = vmatpush1.msra.mxu0 0.0
      %788 = vmatprep.subr.mxu0 0.0
      %789 = vmatpush1.msra.mxu0 %v764
      %790 = vmatprep.subr.mxu0 0.0
      %791 = vmatpush1.msra.mxu0 %v755
      %792 = vmatprep.subr.mxu0 0.0
      %793 = vmatpush1.msra.mxu0 %v754
      %794 = vmatprep.subr.mxu0 0.0
      %795 = vmatpush1.msra.mxu0 %v753
      %796 = vmatprep.subr.mxu0 0.0
      %797 = vmatpush1.msra.mxu0 %v752
      %798 = vmatprep.subr.mxu0 0.0
      %799 = vmatpush2.msra.mxu0 0.0
      %800 = vmatprep.subr.mxu0 0.0
      %801 = vmatpush2.msra.mxu0 0.0
      %802 = vmatprep.subr.mxu0 0.0
      %803 = vmatpush2.msra.mxu0 0.0
      %804 = vmatprep.subr.mxu0 0.0
      %805 = vmatpush2.msra.mxu0 0.0
      %806 = vmatprep.subr.mxu0 0.0
      %807 = vmatpush2.msra.mxu0 0.0
      %808 = vmatprep.subr.mxu0 0.0
      %809 = vmatpush2.msra.mxu0 0.0
      %810 = vmatprep.subr.mxu0 0.0
      %811 = vmatpush2.msra.mxu0 0.0
      %812 = vmatprep.subr.mxu0 0.0
      %813 = vmatpush2.msra.mxu0 0.0
      %814 = vmatprep.subr.mxu0 0.0
      %815 = vmatpush2.msra.mxu0 0.0
      %816 = vmatprep.subr.mxu0 0.0
      %817 = vmatpush2.msra.mxu0 0.0
      %818 = vmatprep.subr.mxu0 0.0
      %819 = vmatpush2.msra.mxu0 0.0
      %820 = vmatprep.subr.mxu0 0.0
      %821 = vmatpush2.msra.mxu0 0.0
      %822 = vmatprep.subr.mxu0 0.0
      %823 = vmatpush2.msra.mxu0 0.0
      %824 = vmatprep.subr.mxu0 0.0
      %825 = vmatpush2.msra.mxu0 0.0
      %826 = vmatprep.subr.mxu0 0.0
      %827 = vmatpush2.msra.mxu0 0.0
      %828 = vmatprep.subr.mxu0 0.0
      %829 = vmatpush2.msra.mxu0 0.0
      %830 = vmatprep.mubr.f32.mxu0 0.0
      %831 = vmatmul.mubr.f32.gmra.mxu0 %v762
      %v832 = vpop.f32.mrf.mxu0
      %v833 = vadd.f32 %v759, %v832
      %v834 = vpop.f32.mrf.mxu0
      %835 = vdwg.mxu0
      %837 = vset.pattern.permute.xlu0 0
      %838 = vperm.xlu0 %837, %v290
      %v839 = vpop.permute.xlu0 %838
      %v842 = vsel %vm324, %v285, 0
      %844 = vmatprep.subr.mxu0 0.0
      %845 = vmatpush1.msra.mxu0 0.0
      %846 = vmatprep.subr.mxu0 0.0
      %847 = vmatpush1.msra.mxu0 0.0
      %848 = vmatprep.subr.mxu0 0.0
      %849 = vmatpush1.msra.mxu0 0.0
      %850 = vmatprep.subr.mxu0 0.0
      %851 = vmatpush1.msra.mxu0 0.0
      %852 = vmatprep.subr.mxu0 0.0
      %853 = vmatpush1.msra.mxu0 0.0
      %854 = vmatprep.subr.mxu0 0.0
      %855 = vmatpush1.msra.mxu0 0.0
      %856 = vmatprep.subr.mxu0 0.0
      %857 = vmatpush1.msra.mxu0 0.0
      %858 = vmatprep.subr.mxu0 0.0
      %859 = vmatpush1.msra.mxu0 0.0
      %860 = vmatprep.subr.mxu0 0.0
      %861 = vmatpush1.msra.mxu0 0.0
      %862 = vmatprep.subr.mxu0 0.0
      %863 = vmatpush1.msra.mxu0 0.0
      %864 = vmatprep.subr.mxu0 0.0
      %865 = vmatpush1.msra.mxu0 0.0
      %866 = vmatprep.subr.mxu0 0.0
      %867 = vmatpush1.msra.mxu0 %v646
      %868 = vmatprep.subr.mxu0 0.0
      %869 = vmatpush1.msra.mxu0 %v645
      %870 = vmatprep.subr.mxu0 0.0
      %871 = vmatpush1.msra.mxu0 %v644
      %872 = vmatprep.subr.mxu0 0.0
      %873 = vmatpush1.msra.mxu0 %v643
      %874 = vmatprep.subr.mxu0 0.0
      %875 = vmatpush1.msra.mxu0 %v322
      %876 = vmatprep.subr.mxu0 0.0
      %877 = vmatpush2.msra.mxu0 0.0
      %878 = vmatprep.subr.mxu0 0.0
      %879 = vmatpush2.msra.mxu0 0.0
      %880 = vmatprep.subr.mxu0 0.0
      %881 = vmatpush2.msra.mxu0 0.0
      %882 = vmatprep.subr.mxu0 0.0
      %883 = vmatpush2.msra.mxu0 0.0
      %884 = vmatprep.subr.mxu0 0.0
      %885 = vmatpush2.msra.mxu0 0.0
      %886 = vmatprep.subr.mxu0 0.0
      %887 = vmatpush2.msra.mxu0 0.0
      %888 = vmatprep.subr.mxu0 0.0
      %889 = vmatpush2.msra.mxu0 0.0
      %890 = vmatprep.subr.mxu0 0.0
      %891 = vmatpush2.msra.mxu0 0.0
      %892 = vmatprep.subr.mxu0 0.0
      %893 = vmatpush2.msra.mxu0 0.0
      %894 = vmatprep.subr.mxu0 0.0
      %895 = vmatpush2.msra.mxu0 0.0
      %896 = vmatprep.subr.mxu0 0.0
      %897 = vmatpush2.msra.mxu0 0.0
      %898 = vmatprep.subr.mxu0 0.0
      %899 = vmatpush2.msra.mxu0 0.0
      %900 = vmatprep.subr.mxu0 0.0
      %901 = vmatpush2.msra.mxu0 0.0
      %902 = vmatprep.subr.mxu0 0.0
      %903 = vmatpush2.msra.mxu0 0.0
      %904 = vmatprep.subr.mxu0 0.0
      %905 = vmatpush2.msra.mxu0 0.0
      %906 = vmatprep.subr.mxu0 0.0
      %907 = vmatpush2.msra.mxu0 0.0
      %908 = vmatprep.mubr.f32.mxu0 0.0
      %909 = vmatmul.mubr.f32.gmra.mxu0 %v842
      %v910 = vpop.f32.mrf.mxu0
      %v911 = vadd.f32 %v839, %v910
      %v912 = vpop.f32.mrf.mxu0
      %913 = vdwg.mxu0
      %vm914 = vcmask 650240
      %915 = vst.msk [vmem:[%s276] sm:$0xf] %vm914, %v833
      %916 = vst.msk [vmem:[%s280] sm:$0xf] %vm914, %v911
      %p917 = scmp.lt.s32.totalorder %s18, 1
      %s918 = scalar_select %p917, %s18, 1
      %s919 = smul.addr %s918, 4
      %s920 = scalar_lea.vmem %s5, %s919
      %p921 = scmp.lt.s32.totalorder %s18, 1
      %s922 = scalar_select %p921, %s18, 1
      %s923 = smul.addr %s922, 4
      %s924 = scalar_lea.vmem %s6, %s923
      // Predicated region
      $region41: #{_restrict_forward.1} parent=39 // pred_check
        %p925 = pneg %p151
      $region42: #{_restrict_forward.1} parent=39 // pred_check_branch
        %927 = sbr.rel (%p925) target = $region44
      $region43: #{_restrict_forward.1} parent=39 // pred_region
        _
      $region44: #{_restrict_forward.1} parent=39 // pred_fallthru
        _
      // Predicated region
      $region45: #{_restrict_forward.1} parent=39 // pred_check
        %p928 = pneg %p177
      $region46: #{_restrict_forward.1} parent=39 // pred_check_branch
        %930 = sbr.rel (%p928) target = $region48
      $region47: #{_restrict_forward.1} parent=39 // pred_region
        _
      $region48: #{_restrict_forward.1} parent=39 // pred_fallthru
        _
    $region40: #{_restrict_forward.1} parent=5 // pred_fallthru
      _
    %p931 = scmp.le.s32.totalorder 2, %s13
    // Predicated region
    $region49: #{_restrict_forward.1} parent=5 // pred_check
      %p932 = pneg %p931
    $region50: #{_restrict_forward.1} parent=5 // pred_check_branch
      %934 = sbr.rel (%p932) target = $region52
    $region51: #{_restrict_forward.1} parent=5 // pred_region
      %s935 = ssub.s32 %s13, 2
      // Predicated region
      $region53: #{_restrict_forward.1} parent=51 // pred_check
        %p936 = pneg %p157
      $region54: #{_restrict_forward.1} parent=51 // pred_check_branch
        %938 = sbr.rel (%p936) target = $region56
      $region55: #{_restrict_forward.1} parent=51 // pred_region
        %p939 = scmp.lt.s32.totalorder %s19, 1
        %s940 = scalar_select %p939, %s19, 1
        %s941 = smul.addr %s940, 4
        %s942 = scalar_lea.vmem %s5, %s941
      $region56: #{_restrict_forward.1} parent=51 // pred_fallthru
        _
      // Predicated region
      $region57: #{_restrict_forward.1} parent=51 // pred_check
        %p943 = pneg %p183
      $region58: #{_restrict_forward.1} parent=51 // pred_check_branch
        %945 = sbr.rel (%p943) target = $region60
      $region59: #{_restrict_forward.1} parent=51 // pred_region
        %p946 = scmp.lt.s32.totalorder %s19, 1
        %s947 = scalar_select %p946, %s19, 1
        %s948 = smul.addr %s947, 4
        %s949 = scalar_lea.vmem %s6, %s948
      $region60: #{_restrict_forward.1} parent=51 // pred_fallthru
        _
    $region52: #{_restrict_forward.1} parent=5 // pred_fallthru
      _
  $region6: #{_restrict_forward.1} parent=0 // loop_footer
    %s17 = sadd.s32 1, %s13
  $region7: #{_restrict_forward.1} parent=0 // loop_footer_branch
    %12 = sbr.rel target = $region3
  $region8: #{_restrict_forward.1} parent=0 // loop_exit
    _

</llo_original>
